<compile_context>
chip_gen: v6e
topology: v6e:2x2x1
jax: 0.10.0
libtpu: 0.0.40
codegen_flags: <defaults>
</compile_context>

<pallas_src>
import math
from functools import partial

import jax
import jax.numpy as jnp
from jax import lax
from jax.experimental import pallas as pl
from jax.experimental.pallas import tpu as pltpu

NUM_HEADS = 4


def _pick_batch_block(batch):
    """Largest divisor of `batch` that is <= 8 and keeps >= 2 grid steps."""
    if batch <= 1:
        return 1
    best = 1
    for cand in range(1, min(8, batch) + 1):
        if batch % cand == 0 and batch // cand >= 2:
            best = cand
    return best


# ----------------------------------------------------------------------------
# Fused forward kernel: one grid step = one block of batch elements.
# ----------------------------------------------------------------------------
def _mma_kernel(text_ref, audio_ref, visual_ref,
                wq_ref, wkva_ref, wkvv_ref, wo_ref, bias_ref,
                out_ref, *, num_heads, compute_dtype):
    H = wq_ref.shape[0]
    dh = H // num_heads
    cd = compute_dtype

    bblk, lq, _ = text_ref.shape
    la = audio_ref.shape[1]
    lv = visual_ref.shape[1]

    bias = bias_ref[...]                        # (4, 2H) f32
    b_q = bias[0:1, :H]                         # (1, H)
    b_kv_a = bias[1:2, :]                       # (1, 2H)
    b_kv_v = bias[2:3, :]                       # (1, 2H)
    b_o = bias[3:4, :H]                         # (1, H)

    # Flatten the batch block onto the sublane axis -> fat projection matmuls.
    t = text_ref[...].reshape(bblk * lq, H).astype(cd)
    a = audio_ref[...].reshape(bblk * la, H).astype(cd)
    v = visual_ref[...].reshape(bblk * lv, H).astype(cd)

    # Composed projections (modality FCs folded in on the host); f32
    # accumulation, f32 bias add (elementwise math stays f32 even in bf16).
    q = jnp.dot(t, wq_ref[...], preferred_element_type=jnp.float32) + b_q          # (B*Lq, H)
    kv_a = jnp.dot(a, wkva_ref[...], preferred_element_type=jnp.float32) + b_kv_a  # (B*La, 2H)
    kv_v = jnp.dot(v, wkvv_ref[...], preferred_element_type=jnp.float32) + b_kv_v  # (B*Lv, 2H)

    # Attention per batch element / per head (static unroll at these shapes).
    outs = []
    for b in range(bblk):
        qb = q[b * lq:(b + 1) * lq, :]                                   # (Lq, H)
        kvb = jnp.concatenate([kv_a[b * la:(b + 1) * la, :],
                               kv_v[b * lv:(b + 1) * lv, :]], axis=0)    # (Lk, 2H)
        heads = []
        for h in range(num_heads):
            hs = slice(h * dh, (h + 1) * dh)
            qh = qb[:, hs].astype(cd)
            kh = kvb[:, hs].astype(cd)
            vh = kvb[:, H + h * dh:H + (h + 1) * dh].astype(cd)
            # contract the LAST dims of both operands -> no explicit k
            # transpose; the 1/sqrt(dh) scale is folded into W_q_eff.
            s = lax.dot_general(qh, kh, (((1,), (1,)), ((), ())),
                                preferred_element_type=jnp.float32)      # (Lq, Lk)
            s = s - jnp.max(s, axis=-1, keepdims=True)
            p = jnp.exp(s)
            p = p / jnp.sum(p, axis=-1, keepdims=True)                   # exact softmax
            heads.append(jnp.dot(p.astype(cd), vh,
                                 preferred_element_type=jnp.float32))    # (Lq, dh)
        outs.append(jnp.concatenate(heads, axis=-1))                     # (Lq, H)

    # Single fat out-projection over the whole batch block.
    o = jnp.concatenate(outs, axis=0)                                    # (B*Lq, H)
    o = jnp.dot(o.astype(cd), wo_ref[...],
                preferred_element_type=jnp.float32) + b_o                # (B*Lq, H)
    for b in range(bblk):
        out_ref[b] = o[b * lq:(b + 1) * lq, :].astype(out_ref.dtype)


# ----------------------------------------------------------------------------
# Wrapper: host-side weight composition + pallas_call
# ----------------------------------------------------------------------------
def multimodal_attention(params, text_feat, audio_feat, visual_feat,
                         compute_dtype=jnp.float32):
    B, Lq, H = text_feat.shape
    La = audio_feat.shape[1]
    Lv = visual_feat.shape[1]
    Lk = La + Lv
    nh = NUM_HEADS
    dh = H // nh

    # ---- host-side weight composition (f32).  In production these would be
    # precomputed once per model, not per forward call. ----------------------
    inv_scale = 1.0 / math.sqrt(dh)
    w_kv = jnp.concatenate([params["wk"], params["wv"]], axis=1)          # (H, 2H)
    b_kv = jnp.concatenate([params["bk"], params["bv"]])                  # (2H,)

    wq_eff = (params["fc_text_w"] @ params["wq"]) * inv_scale             # (H, H)
    bq_eff = (params["fc_text_b"] @ params["wq"] + params["bq"]) * inv_scale
    wkv_a = params["fc_audio_w"] @ w_kv                                   # (H, 2H)
    bkv_a = params["fc_audio_b"] @ w_kv + b_kv
    wkv_v = params["fc_visual_w"] @ w_kv                                  # (H, 2H)
    bkv_v = params["fc_visual_b"] @ w_kv + b_kv

    pad = lambda x: jnp.pad(x, (0, 2 * H - x.shape[0]))
    bias_pack = jnp.stack(
        [pad(bq_eff), bkv_a, bkv_v, pad(params["bo"])]).astype(jnp.float32)

    cd = compute_dtype
    wq_eff = wq_eff.astype(cd)
    wkv_a = wkv_a.astype(cd)
    wkv_v = wkv_v.astype(cd)
    wo = params["wo"].astype(cd)

    # ---- grid / specs -------------------------------------------------------
    bblk = _pick_batch_block(B)
    grid = (B // bblk,)
    const = lambda shape: pl.BlockSpec(shape, lambda i: (0, 0))  # VMEM-resident

    flops = (2 * B * (Lq * H * H + (La + Lv) * H * 2 * H)        # projections
             + 2 * B * nh * Lq * Lk * dh * 2                     # scores + p@v
             + 2 * B * Lq * H * H)                               # out-projection
    out_bytes = B * Lq * H * text_feat.dtype.itemsize
    bytes_accessed = (text_feat.nbytes + audio_feat.nbytes + visual_feat.nbytes
                      + wq_eff.nbytes + wkv_a.nbytes + wkv_v.nbytes + wo.nbytes
                      + bias_pack.nbytes + out_bytes)

    kernel = partial(_mma_kernel, num_heads=nh, compute_dtype=cd)

    return pl.pallas_call(
        kernel,
        out_shape=jax.ShapeDtypeStruct((B, Lq, H), text_feat.dtype),
        grid=grid,
        in_specs=[
            pl.BlockSpec((bblk, Lq, H), lambda i: (i, 0, 0)),
            pl.BlockSpec((bblk, La, H), lambda i: (i, 0, 0)),
            pl.BlockSpec((bblk, Lv, H), lambda i: (i, 0, 0)),
            const((H, H)),          # W_q_eff (scale folded in)
            const((H, 2 * H)),      # W_kv_audio  = fc_audio_w @ [Wk|Wv]
            const((H, 2 * H)),      # W_kv_visual = fc_visual_w @ [Wk|Wv]
            const((H, H)),          # W_o
            const((4, 2 * H)),      # packed biases (f32)
        ],
        out_specs=pl.BlockSpec((bblk, Lq, H), lambda i: (i, 0, 0)),
        compiler_params=pltpu.CompilerParams(
            dimension_semantics=("parallel",),
            vmem_limit_bytes=32 * 1024 * 1024),
        cost_estimate=pl.CostEstimate(
            flops=flops,
            transcendentals=B * nh * Lq * Lk,
            bytes_accessed=bytes_accessed),
    )(text_feat, audio_feat, visual_feat,
      wq_eff, wkv_a, wkv_v, wo, bias_pack)


# ----------------------------------------------------------------------------
# Parameter init (deterministic; shapes implied by the nn.Module __init__)
# ----------------------------------------------------------------------------
def init_params(hidden_dim, key):
    ks = jax.random.split(key, 16)
    bound = 1.0 / math.sqrt(hidden_dim)

    def u(k, shape, b=bound):
        return jax.random.uniform(k, shape, jnp.float32, -b, b)

    return {
        # fc_text / fc_audio / fc_visual : stored as (in, out) == W^T
        "fc_text_w": u(ks[0], (hidden_dim, hidden_dim)),
        "fc_text_b": u(ks[1], (hidden_dim,)),
        "fc_audio_w": u(ks[2], (hidden_dim, hidden_dim)),
        "fc_audio_b": u(ks[3], (hidden_dim,)),
        "fc_visual_w": u(ks[4], (hidden_dim, hidden_dim)),
        "fc_visual_b": u(ks[5], (hidden_dim,)),
        # MultiheadAttention in-projection (Q/K/V) + out-projection
        "wq": u(ks[6], (hidden_dim, hidden_dim)),
        "bq": jnp.zeros((hidden_dim,), jnp.float32),
        "wk": u(ks[7], (hidden_dim, hidden_dim)),
        "bk": jnp.zeros((hidden_dim,), jnp.float32),
        "wv": u(ks[8], (hidden_dim, hidden_dim)),
        "bv": jnp.zeros((hidden_dim,), jnp.float32),
        "wo": u(ks[9], (hidden_dim, hidden_dim)),
        "bo": jnp.zeros((hidden_dim,), jnp.float32),
    }


# ----------------------------------------------------------------------------
# Pure-JAX reference (uncomposed math, same as the PyTorch module)
# ----------------------------------------------------------------------------
def reference(params, text_feat, audio_feat, visual_feat):
    B, Lq, H = text_feat.shape
    nh = NUM_HEADS
    dh = H // nh
    t = text_feat @ params["fc_text_w"] + params["fc_text_b"]
    a = audio_feat @ params["fc_audio_w"] + params["fc_audio_b"]
    v = visual_feat @ params["fc_visual_w"] + params["fc_visual_b"]
    av = jnp.concatenate([a, v], axis=1)
    Lk = av.shape[1]
    q = (t @ params["wq"] + params["bq"]).reshape(B, Lq, nh, dh).transpose(0, 2, 1, 3)
    k = (av @ params["wk"] + params["bk"]).reshape(B, Lk, nh, dh).transpose(0, 2, 1, 3)
    vv = (av @ params["wv"] + params["bv"]).reshape(B, Lk, nh, dh).transpose(0, 2, 1, 3)
    s = jnp.einsum("bhqd,bhkd->bhqk", q, k) / math.sqrt(dh)
    p = jax.nn.softmax(s, axis=-1)
    o = jnp.einsum("bhqk,bhkd->bhqd", p, vv).transpose(0, 2, 1, 3).reshape(B, Lq, H)
    return o @ params["wo"] + params["bo"]


if __name__ == "__main__":
    B, Lq, La, Lv, H = 4, 8, 8, 8, 32   # small shapes; exercises bblk=2, grid=2

    key = jax.random.PRNGKey(0)
    kp, kt, ka, kv = jax.random.split(key, 4)
    params = init_params(H, kp)

    text_feat = jax.random.normal(kt, (B, Lq, H), jnp.float32)
    audio_feat = jax.random.normal(ka, (B, La, H), jnp.float32)
    visual_feat = jax.random.normal(kv, (B, Lv, H), jnp.float32)

    fwd = jax.jit(multimodal_attention, static_argnames=("compute_dtype",))
    # NOTE: on v6e/v7x pass compute_dtype=jnp.bfloat16 for the fast MXU path
    # (f32 accumulation kept via preferred_element_type; softmax stays f32).
    out = jax.block_until_ready(fwd(params, text_feat, audio_feat, visual_feat))

    ref = reference(params, text_feat, audio_feat, visual_feat)
    assert out.shape == (B, Lq, H)
    assert jnp.allclose(out, ref, atol=1e-2, rtol=1e-2), "mismatch vs reference"

    print("KERNEL_OK")
</pallas_src>

<mosaic_0001>
module attributes {stable_mosaic.version = 11 : i64} {
  func.func @_mma_kernel(%arg0: i32, %arg1: memref<2x8x32xf32, #tpu.memory_space<vmem>>, %arg2: memref<2x8x32xf32, #tpu.memory_space<vmem>>, %arg3: memref<2x8x32xf32, #tpu.memory_space<vmem>>, %arg4: memref<32x32xf32, #tpu.memory_space<vmem>>, %arg5: memref<32x64xf32, #tpu.memory_space<vmem>>, %arg6: memref<32x64xf32, #tpu.memory_space<vmem>>, %arg7: memref<32x32xf32, #tpu.memory_space<vmem>>, %arg8: memref<4x64xf32, #tpu.memory_space<vmem>>, %arg9: memref<2x8x32xf32, #tpu.memory_space<vmem>>) attributes {dimension_semantics = [#tpu.dimension_semantics<parallel>], iteration_bounds = array<i64: 2>, scalar_prefetch = 0 : i64, scratch_operands = 0 : i64, tpu.core_type = #tpu.core_type<tc>, window_params = [{transform_indices = @transform_0, window_bounds = array<i64: 2, 8, 32>}, {transform_indices = @transform_1, window_bounds = array<i64: 2, 8, 32>}, {transform_indices = @transform_2, window_bounds = array<i64: 2, 8, 32>}, {pipeline_mode = #tpu.pipeline_mode<synchronous>, transform_indices = @transform_3, window_bounds = array<i64: 32, 32>}, {pipeline_mode = #tpu.pipeline_mode<synchronous>, transform_indices = @transform_4, window_bounds = array<i64: 32, 64>}, {pipeline_mode = #tpu.pipeline_mode<synchronous>, transform_indices = @transform_5, window_bounds = array<i64: 32, 64>}, {pipeline_mode = #tpu.pipeline_mode<synchronous>, transform_indices = @transform_6, window_bounds = array<i64: 32, 32>}, {pipeline_mode = #tpu.pipeline_mode<synchronous>, transform_indices = @transform_7, window_bounds = array<i64: 4, 64>}, {transform_indices = @transform_8, window_bounds = array<i64: 2, 8, 32>}]} {
    %c0 = arith.constant 0 : index
    %c0_0 = arith.constant 0 : index
    %0 = vector.load %arg8[%c0, %c0_0] : memref<4x64xf32, #tpu.memory_space<vmem>>, vector<4x64xf32>
    %1 = vector.extract_strided_slice %0 {offsets = [0, 0], sizes = [1, 32], strides = [1, 1]} : vector<4x64xf32> to vector<1x32xf32>
    %2 = vector.extract_strided_slice %0 {offsets = [1, 0], sizes = [1, 64], strides = [1, 1]} : vector<4x64xf32> to vector<1x64xf32>
    %3 = vector.extract_strided_slice %0 {offsets = [2, 0], sizes = [1, 64], strides = [1, 1]} : vector<4x64xf32> to vector<1x64xf32>
    %4 = vector.extract_strided_slice %0 {offsets = [3, 0], sizes = [1, 32], strides = [1, 1]} : vector<4x64xf32> to vector<1x32xf32>
    %c0_1 = arith.constant 0 : index
    %c0_2 = arith.constant 0 : index
    %c0_3 = arith.constant 0 : index
    %5 = vector.load %arg1[%c0_1, %c0_2, %c0_3] : memref<2x8x32xf32, #tpu.memory_space<vmem>>, vector<2x8x32xf32>
    %6 = vector.shape_cast %5 : vector<2x8x32xf32> to vector<16x32xf32>
    %c0_4 = arith.constant 0 : index
    %c0_5 = arith.constant 0 : index
    %c0_6 = arith.constant 0 : index
    %7 = vector.load %arg2[%c0_4, %c0_5, %c0_6] : memref<2x8x32xf32, #tpu.memory_space<vmem>>, vector<2x8x32xf32>
    %8 = vector.shape_cast %7 : vector<2x8x32xf32> to vector<16x32xf32>
    %c0_7 = arith.constant 0 : index
    %c0_8 = arith.constant 0 : index
    %c0_9 = arith.constant 0 : index
    %9 = vector.load %arg3[%c0_7, %c0_8, %c0_9] : memref<2x8x32xf32, #tpu.memory_space<vmem>>, vector<2x8x32xf32>
    %10 = vector.shape_cast %9 : vector<2x8x32xf32> to vector<16x32xf32>
    %c0_10 = arith.constant 0 : index
    %c0_11 = arith.constant 0 : index
    %11 = vector.load %arg4[%c0_10, %c0_11] : memref<32x32xf32, #tpu.memory_space<vmem>>, vector<32x32xf32>
    %cst = arith.constant dense<0.000000e+00> : vector<16x32xf32>
    %12 = tpu.matmul %6, %11, %cst {dimension_numbers = #tpu.dot_dimension_numbers<[1], [0], [0], [1], [0, 0, 1, 1], [], []>} : vector<16x32xf32>, vector<32x32xf32>, vector<16x32xf32> -> vector<16x32xf32>
    %13 = vector.broadcast %1 : vector<1x32xf32> to vector<16x32xf32>
    %14 = arith.addf %12, %13 : vector<16x32xf32>
    %c0_12 = arith.constant 0 : index
    %c0_13 = arith.constant 0 : index
    %15 = vector.load %arg5[%c0_12, %c0_13] : memref<32x64xf32, #tpu.memory_space<vmem>>, vector<32x64xf32>
    %cst_14 = arith.constant dense<0.000000e+00> : vector<16x64xf32>
    %16 = tpu.matmul %8, %15, %cst_14 {dimension_numbers = #tpu.dot_dimension_numbers<[1], [0], [0], [1], [0, 0, 1, 1], [], []>} : vector<16x32xf32>, vector<32x64xf32>, vector<16x64xf32> -> vector<16x64xf32>
    %17 = vector.broadcast %2 : vector<1x64xf32> to vector<16x64xf32>
    %18 = arith.addf %16, %17 : vector<16x64xf32>
    %c0_15 = arith.constant 0 : index
    %c0_16 = arith.constant 0 : index
    %19 = vector.load %arg6[%c0_15, %c0_16] : memref<32x64xf32, #tpu.memory_space<vmem>>, vector<32x64xf32>
    %cst_17 = arith.constant dense<0.000000e+00> : vector<16x64xf32>
    %20 = tpu.matmul %10, %19, %cst_17 {dimension_numbers = #tpu.dot_dimension_numbers<[1], [0], [0], [1], [0, 0, 1, 1], [], []>} : vector<16x32xf32>, vector<32x64xf32>, vector<16x64xf32> -> vector<16x64xf32>
    %21 = vector.broadcast %3 : vector<1x64xf32> to vector<16x64xf32>
    %22 = arith.addf %20, %21 : vector<16x64xf32>
    %23 = vector.extract_strided_slice %14 {offsets = [0, 0], sizes = [8, 32], strides = [1, 1]} : vector<16x32xf32> to vector<8x32xf32>
    %24 = vector.extract_strided_slice %18 {offsets = [0, 0], sizes = [8, 64], strides = [1, 1]} : vector<16x64xf32> to vector<8x64xf32>
    %25 = vector.extract_strided_slice %22 {offsets = [0, 0], sizes = [8, 64], strides = [1, 1]} : vector<16x64xf32> to vector<8x64xf32>
    %26 = tpu.concatenate %24, %25 in 0 : vector<8x64xf32>, vector<8x64xf32> -> vector<16x64xf32>
    %27 = vector.extract_strided_slice %23 {offsets = [0, 0], sizes = [8, 8], strides = [1, 1]} : vector<8x32xf32> to vector<8x8xf32>
    %28 = vector.extract_strided_slice %26 {offsets = [0, 0], sizes = [16, 8], strides = [1, 1]} : vector<16x64xf32> to vector<16x8xf32>
    %29 = vector.extract_strided_slice %26 {offsets = [0, 32], sizes = [16, 8], strides = [1, 1]} : vector<16x64xf32> to vector<16x8xf32>
    %cst_18 = arith.constant dense<0.000000e+00> : vector<8x16xf32>
    %30 = tpu.matmul %27, %28, %cst_18 {dimension_numbers = #tpu.dot_dimension_numbers<[1], [1], [0], [0], [0, 0, 1, 0], [], []>} : vector<8x8xf32>, vector<16x8xf32>, vector<8x16xf32> -> vector<8x16xf32>
    %cst_19 = arith.constant dense<0xFF800000> : vector<8xf32>
    %31 = vector.multi_reduction <maximumf>, %30, %cst_19 [1] : vector<8x16xf32> to vector<8xf32>
    %32 = vector.shape_cast %31 : vector<8xf32> to vector<8x1xf32>
    %33 = vector.broadcast %32 : vector<8x1xf32> to vector<8x16xf32>
    %34 = arith.subf %30, %33 : vector<8x16xf32>
    %35 = math.exp %34 : vector<8x16xf32>
    %cst_20 = arith.constant dense<0.000000e+00> : vector<8xf32>
    %36 = vector.multi_reduction <add>, %35, %cst_20 [1] : vector<8x16xf32> to vector<8xf32>
    %37 = vector.shape_cast %36 : vector<8xf32> to vector<8x1xf32>
    %38 = vector.broadcast %37 : vector<8x1xf32> to vector<8x16xf32>
    %39 = arith.divf %35, %38 : vector<8x16xf32>
    %cst_21 = arith.constant dense<0.000000e+00> : vector<8x8xf32>
    %40 = tpu.matmul %39, %29, %cst_21 {dimension_numbers = #tpu.dot_dimension_numbers<[1], [0], [0], [1], [0, 0, 1, 1], [], []>} : vector<8x16xf32>, vector<16x8xf32>, vector<8x8xf32> -> vector<8x8xf32>
    %41 = vector.extract_strided_slice %23 {offsets = [0, 8], sizes = [8, 8], strides = [1, 1]} : vector<8x32xf32> to vector<8x8xf32>
    %42 = vector.extract_strided_slice %26 {offsets = [0, 8], sizes = [16, 8], strides = [1, 1]} : vector<16x64xf32> to vector<16x8xf32>
    %43 = vector.extract_strided_slice %26 {offsets = [0, 40], sizes = [16, 8], strides = [1, 1]} : vector<16x64xf32> to vector<16x8xf32>
    %cst_22 = arith.constant dense<0.000000e+00> : vector<8x16xf32>
    %44 = tpu.matmul %41, %42, %cst_22 {dimension_numbers = #tpu.dot_dimension_numbers<[1], [1], [0], [0], [0, 0, 1, 0], [], []>} : vector<8x8xf32>, vector<16x8xf32>, vector<8x16xf32> -> vector<8x16xf32>
    %cst_23 = arith.constant dense<0xFF800000> : vector<8xf32>
    %45 = vector.multi_reduction <maximumf>, %44, %cst_23 [1] : vector<8x16xf32> to vector<8xf32>
    %46 = vector.shape_cast %45 : vector<8xf32> to vector<8x1xf32>
    %47 = vector.broadcast %46 : vector<8x1xf32> to vector<8x16xf32>
    %48 = arith.subf %44, %47 : vector<8x16xf32>
    %49 = math.exp %48 : vector<8x16xf32>
    %cst_24 = arith.constant dense<0.000000e+00> : vector<8xf32>
    %50 = vector.multi_reduction <add>, %49, %cst_24 [1] : vector<8x16xf32> to vector<8xf32>
    %51 = vector.shape_cast %50 : vector<8xf32> to vector<8x1xf32>
    %52 = vector.broadcast %51 : vector<8x1xf32> to vector<8x16xf32>
    %53 = arith.divf %49, %52 : vector<8x16xf32>
    %cst_25 = arith.constant dense<0.000000e+00> : vector<8x8xf32>
    %54 = tpu.matmul %53, %43, %cst_25 {dimension_numbers = #tpu.dot_dimension_numbers<[1], [0], [0], [1], [0, 0, 1, 1], [], []>} : vector<8x16xf32>, vector<16x8xf32>, vector<8x8xf32> -> vector<8x8xf32>
    %55 = vector.extract_strided_slice %23 {offsets = [0, 16], sizes = [8, 8], strides = [1, 1]} : vector<8x32xf32> to vector<8x8xf32>
    %56 = vector.extract_strided_slice %26 {offsets = [0, 16], sizes = [16, 8], strides = [1, 1]} : vector<16x64xf32> to vector<16x8xf32>
    %57 = vector.extract_strided_slice %26 {offsets = [0, 48], sizes = [16, 8], strides = [1, 1]} : vector<16x64xf32> to vector<16x8xf32>
    %cst_26 = arith.constant dense<0.000000e+00> : vector<8x16xf32>
    %58 = tpu.matmul %55, %56, %cst_26 {dimension_numbers = #tpu.dot_dimension_numbers<[1], [1], [0], [0], [0, 0, 1, 0], [], []>} : vector<8x8xf32>, vector<16x8xf32>, vector<8x16xf32> -> vector<8x16xf32>
    %cst_27 = arith.constant dense<0xFF800000> : vector<8xf32>
    %59 = vector.multi_reduction <maximumf>, %58, %cst_27 [1] : vector<8x16xf32> to vector<8xf32>
    %60 = vector.shape_cast %59 : vector<8xf32> to vector<8x1xf32>
    %61 = vector.broadcast %60 : vector<8x1xf32> to vector<8x16xf32>
    %62 = arith.subf %58, %61 : vector<8x16xf32>
    %63 = math.exp %62 : vector<8x16xf32>
    %cst_28 = arith.constant dense<0.000000e+00> : vector<8xf32>
    %64 = vector.multi_reduction <add>, %63, %cst_28 [1] : vector<8x16xf32> to vector<8xf32>
    %65 = vector.shape_cast %64 : vector<8xf32> to vector<8x1xf32>
    %66 = vector.broadcast %65 : vector<8x1xf32> to vector<8x16xf32>
    %67 = arith.divf %63, %66 : vector<8x16xf32>
    %cst_29 = arith.constant dense<0.000000e+00> : vector<8x8xf32>
    %68 = tpu.matmul %67, %57, %cst_29 {dimension_numbers = #tpu.dot_dimension_numbers<[1], [0], [0], [1], [0, 0, 1, 1], [], []>} : vector<8x16xf32>, vector<16x8xf32>, vector<8x8xf32> -> vector<8x8xf32>
    %69 = vector.extract_strided_slice %23 {offsets = [0, 24], sizes = [8, 8], strides = [1, 1]} : vector<8x32xf32> to vector<8x8xf32>
    %70 = vector.extract_strided_slice %26 {offsets = [0, 24], sizes = [16, 8], strides = [1, 1]} : vector<16x64xf32> to vector<16x8xf32>
    %71 = vector.extract_strided_slice %26 {offsets = [0, 56], sizes = [16, 8], strides = [1, 1]} : vector<16x64xf32> to vector<16x8xf32>
    %cst_30 = arith.constant dense<0.000000e+00> : vector<8x16xf32>
    %72 = tpu.matmul %69, %70, %cst_30 {dimension_numbers = #tpu.dot_dimension_numbers<[1], [1], [0], [0], [0, 0, 1, 0], [], []>} : vector<8x8xf32>, vector<16x8xf32>, vector<8x16xf32> -> vector<8x16xf32>
    %cst_31 = arith.constant dense<0xFF800000> : vector<8xf32>
    %73 = vector.multi_reduction <maximumf>, %72, %cst_31 [1] : vector<8x16xf32> to vector<8xf32>
    %74 = vector.shape_cast %73 : vector<8xf32> to vector<8x1xf32>
    %75 = vector.broadcast %74 : vector<8x1xf32> to vector<8x16xf32>
    %76 = arith.subf %72, %75 : vector<8x16xf32>
    %77 = math.exp %76 : vector<8x16xf32>
    %cst_32 = arith.constant dense<0.000000e+00> : vector<8xf32>
    %78 = vector.multi_reduction <add>, %77, %cst_32 [1] : vector<8x16xf32> to vector<8xf32>
    %79 = vector.shape_cast %78 : vector<8xf32> to vector<8x1xf32>
    %80 = vector.broadcast %79 : vector<8x1xf32> to vector<8x16xf32>
    %81 = arith.divf %77, %80 : vector<8x16xf32>
    %cst_33 = arith.constant dense<0.000000e+00> : vector<8x8xf32>
    %82 = tpu.matmul %81, %71, %cst_33 {dimension_numbers = #tpu.dot_dimension_numbers<[1], [0], [0], [1], [0, 0, 1, 1], [], []>} : vector<8x16xf32>, vector<16x8xf32>, vector<8x8xf32> -> vector<8x8xf32>
    %83 = tpu.concatenate %40, %54, %68, %82 in 1 : vector<8x8xf32>, vector<8x8xf32>, vector<8x8xf32>, vector<8x8xf32> -> vector<8x32xf32>
    %84 = vector.extract_strided_slice %14 {offsets = [8, 0], sizes = [8, 32], strides = [1, 1]} : vector<16x32xf32> to vector<8x32xf32>
    %85 = vector.extract_strided_slice %18 {offsets = [8, 0], sizes = [8, 64], strides = [1, 1]} : vector<16x64xf32> to vector<8x64xf32>
    %86 = vector.extract_strided_slice %22 {offsets = [8, 0], sizes = [8, 64], strides = [1, 1]} : vector<16x64xf32> to vector<8x64xf32>
    %87 = tpu.concatenate %85, %86 in 0 : vector<8x64xf32>, vector<8x64xf32> -> vector<16x64xf32>
    %88 = vector.extract_strided_slice %84 {offsets = [0, 0], sizes = [8, 8], strides = [1, 1]} : vector<8x32xf32> to vector<8x8xf32>
    %89 = vector.extract_strided_slice %87 {offsets = [0, 0], sizes = [16, 8], strides = [1, 1]} : vector<16x64xf32> to vector<16x8xf32>
    %90 = vector.extract_strided_slice %87 {offsets = [0, 32], sizes = [16, 8], strides = [1, 1]} : vector<16x64xf32> to vector<16x8xf32>
    %cst_34 = arith.constant dense<0.000000e+00> : vector<8x16xf32>
    %91 = tpu.matmul %88, %89, %cst_34 {dimension_numbers = #tpu.dot_dimension_numbers<[1], [1], [0], [0], [0, 0, 1, 0], [], []>} : vector<8x8xf32>, vector<16x8xf32>, vector<8x16xf32> -> vector<8x16xf32>
    %cst_35 = arith.constant dense<0xFF800000> : vector<8xf32>
    %92 = vector.multi_reduction <maximumf>, %91, %cst_35 [1] : vector<8x16xf32> to vector<8xf32>
    %93 = vector.shape_cast %92 : vector<8xf32> to vector<8x1xf32>
    %94 = vector.broadcast %93 : vector<8x1xf32> to vector<8x16xf32>
    %95 = arith.subf %91, %94 : vector<8x16xf32>
    %96 = math.exp %95 : vector<8x16xf32>
    %cst_36 = arith.constant dense<0.000000e+00> : vector<8xf32>
    %97 = vector.multi_reduction <add>, %96, %cst_36 [1] : vector<8x16xf32> to vector<8xf32>
    %98 = vector.shape_cast %97 : vector<8xf32> to vector<8x1xf32>
    %99 = vector.broadcast %98 : vector<8x1xf32> to vector<8x16xf32>
    %100 = arith.divf %96, %99 : vector<8x16xf32>
    %cst_37 = arith.constant dense<0.000000e+00> : vector<8x8xf32>
    %101 = tpu.matmul %100, %90, %cst_37 {dimension_numbers = #tpu.dot_dimension_numbers<[1], [0], [0], [1], [0, 0, 1, 1], [], []>} : vector<8x16xf32>, vector<16x8xf32>, vector<8x8xf32> -> vector<8x8xf32>
    %102 = vector.extract_strided_slice %84 {offsets = [0, 8], sizes = [8, 8], strides = [1, 1]} : vector<8x32xf32> to vector<8x8xf32>
    %103 = vector.extract_strided_slice %87 {offsets = [0, 8], sizes = [16, 8], strides = [1, 1]} : vector<16x64xf32> to vector<16x8xf32>
    %104 = vector.extract_strided_slice %87 {offsets = [0, 40], sizes = [16, 8], strides = [1, 1]} : vector<16x64xf32> to vector<16x8xf32>
    %cst_38 = arith.constant dense<0.000000e+00> : vector<8x16xf32>
    %105 = tpu.matmul %102, %103, %cst_38 {dimension_numbers = #tpu.dot_dimension_numbers<[1], [1], [0], [0], [0, 0, 1, 0], [], []>} : vector<8x8xf32>, vector<16x8xf32>, vector<8x16xf32> -> vector<8x16xf32>
    %cst_39 = arith.constant dense<0xFF800000> : vector<8xf32>
    %106 = vector.multi_reduction <maximumf>, %105, %cst_39 [1] : vector<8x16xf32> to vector<8xf32>
    %107 = vector.shape_cast %106 : vector<8xf32> to vector<8x1xf32>
    %108 = vector.broadcast %107 : vector<8x1xf32> to vector<8x16xf32>
    %109 = arith.subf %105, %108 : vector<8x16xf32>
    %110 = math.exp %109 : vector<8x16xf32>
    %cst_40 = arith.constant dense<0.000000e+00> : vector<8xf32>
    %111 = vector.multi_reduction <add>, %110, %cst_40 [1] : vector<8x16xf32> to vector<8xf32>
    %112 = vector.shape_cast %111 : vector<8xf32> to vector<8x1xf32>
    %113 = vector.broadcast %112 : vector<8x1xf32> to vector<8x16xf32>
    %114 = arith.divf %110, %113 : vector<8x16xf32>
    %cst_41 = arith.constant dense<0.000000e+00> : vector<8x8xf32>
    %115 = tpu.matmul %114, %104, %cst_41 {dimension_numbers = #tpu.dot_dimension_numbers<[1], [0], [0], [1], [0, 0, 1, 1], [], []>} : vector<8x16xf32>, vector<16x8xf32>, vector<8x8xf32> -> vector<8x8xf32>
    %116 = vector.extract_strided_slice %84 {offsets = [0, 16], sizes = [8, 8], strides = [1, 1]} : vector<8x32xf32> to vector<8x8xf32>
    %117 = vector.extract_strided_slice %87 {offsets = [0, 16], sizes = [16, 8], strides = [1, 1]} : vector<16x64xf32> to vector<16x8xf32>
    %118 = vector.extract_strided_slice %87 {offsets = [0, 48], sizes = [16, 8], strides = [1, 1]} : vector<16x64xf32> to vector<16x8xf32>
    %cst_42 = arith.constant dense<0.000000e+00> : vector<8x16xf32>
    %119 = tpu.matmul %116, %117, %cst_42 {dimension_numbers = #tpu.dot_dimension_numbers<[1], [1], [0], [0], [0, 0, 1, 0], [], []>} : vector<8x8xf32>, vector<16x8xf32>, vector<8x16xf32> -> vector<8x16xf32>
    %cst_43 = arith.constant dense<0xFF800000> : vector<8xf32>
    %120 = vector.multi_reduction <maximumf>, %119, %cst_43 [1] : vector<8x16xf32> to vector<8xf32>
    %121 = vector.shape_cast %120 : vector<8xf32> to vector<8x1xf32>
    %122 = vector.broadcast %121 : vector<8x1xf32> to vector<8x16xf32>
    %123 = arith.subf %119, %122 : vector<8x16xf32>
    %124 = math.exp %123 : vector<8x16xf32>
    %cst_44 = arith.constant dense<0.000000e+00> : vector<8xf32>
    %125 = vector.multi_reduction <add>, %124, %cst_44 [1] : vector<8x16xf32> to vector<8xf32>
    %126 = vector.shape_cast %125 : vector<8xf32> to vector<8x1xf32>
    %127 = vector.broadcast %126 : vector<8x1xf32> to vector<8x16xf32>
    %128 = arith.divf %124, %127 : vector<8x16xf32>
    %cst_45 = arith.constant dense<0.000000e+00> : vector<8x8xf32>
    %129 = tpu.matmul %128, %118, %cst_45 {dimension_numbers = #tpu.dot_dimension_numbers<[1], [0], [0], [1], [0, 0, 1, 1], [], []>} : vector<8x16xf32>, vector<16x8xf32>, vector<8x8xf32> -> vector<8x8xf32>
    %130 = vector.extract_strided_slice %84 {offsets = [0, 24], sizes = [8, 8], strides = [1, 1]} : vector<8x32xf32> to vector<8x8xf32>
    %131 = vector.extract_strided_slice %87 {offsets = [0, 24], sizes = [16, 8], strides = [1, 1]} : vector<16x64xf32> to vector<16x8xf32>
    %132 = vector.extract_strided_slice %87 {offsets = [0, 56], sizes = [16, 8], strides = [1, 1]} : vector<16x64xf32> to vector<16x8xf32>
    %cst_46 = arith.constant dense<0.000000e+00> : vector<8x16xf32>
    %133 = tpu.matmul %130, %131, %cst_46 {dimension_numbers = #tpu.dot_dimension_numbers<[1], [1], [0], [0], [0, 0, 1, 0], [], []>} : vector<8x8xf32>, vector<16x8xf32>, vector<8x16xf32> -> vector<8x16xf32>
    %cst_47 = arith.constant dense<0xFF800000> : vector<8xf32>
    %134 = vector.multi_reduction <maximumf>, %133, %cst_47 [1] : vector<8x16xf32> to vector<8xf32>
    %135 = vector.shape_cast %134 : vector<8xf32> to vector<8x1xf32>
    %136 = vector.broadcast %135 : vector<8x1xf32> to vector<8x16xf32>
    %137 = arith.subf %133, %136 : vector<8x16xf32>
    %138 = math.exp %137 : vector<8x16xf32>
    %cst_48 = arith.constant dense<0.000000e+00> : vector<8xf32>
    %139 = vector.multi_reduction <add>, %138, %cst_48 [1] : vector<8x16xf32> to vector<8xf32>
    %140 = vector.shape_cast %139 : vector<8xf32> to vector<8x1xf32>
    %141 = vector.broadcast %140 : vector<8x1xf32> to vector<8x16xf32>
    %142 = arith.divf %138, %141 : vector<8x16xf32>
    %cst_49 = arith.constant dense<0.000000e+00> : vector<8x8xf32>
    %143 = tpu.matmul %142, %132, %cst_49 {dimension_numbers = #tpu.dot_dimension_numbers<[1], [0], [0], [1], [0, 0, 1, 1], [], []>} : vector<8x16xf32>, vector<16x8xf32>, vector<8x8xf32> -> vector<8x8xf32>
    %144 = tpu.concatenate %101, %115, %129, %143 in 1 : vector<8x8xf32>, vector<8x8xf32>, vector<8x8xf32>, vector<8x8xf32> -> vector<8x32xf32>
    %145 = tpu.concatenate %83, %144 in 0 : vector<8x32xf32>, vector<8x32xf32> -> vector<16x32xf32>
    %c0_50 = arith.constant 0 : index
    %c0_51 = arith.constant 0 : index
    %146 = vector.load %arg7[%c0_50, %c0_51] : memref<32x32xf32, #tpu.memory_space<vmem>>, vector<32x32xf32>
    %cst_52 = arith.constant dense<0.000000e+00> : vector<16x32xf32>
    %147 = tpu.matmul %145, %146, %cst_52 {dimension_numbers = #tpu.dot_dimension_numbers<[1], [0], [0], [1], [0, 0, 1, 1], [], []>} : vector<16x32xf32>, vector<32x32xf32>, vector<16x32xf32> -> vector<16x32xf32>
    %148 = vector.broadcast %4 : vector<1x32xf32> to vector<16x32xf32>
    %149 = arith.addf %147, %148 : vector<16x32xf32>
    %150 = vector.extract_strided_slice %149 {offsets = [0, 0], sizes = [8, 32], strides = [1, 1]} : vector<16x32xf32> to vector<8x32xf32>
    %c0_53 = arith.constant 0 : index
    %c0_54 = arith.constant 0 : index
    %c0_55 = arith.constant 0 : index
    %151 = vector.load %arg9[%c0_53, %c0_54, %c0_55] : memref<2x8x32xf32, #tpu.memory_space<vmem>>, vector<1x8x32xf32>
    %152 = vector.shape_cast %151 : vector<1x8x32xf32> to vector<8x32xf32>
    %153 = vector.shape_cast %150 : vector<8x32xf32> to vector<1x8x32xf32>
    tpu.vector_store %arg9[%c0_53, %c0_54, %c0_55], %153 {strides = array<i32>} : memref<2x8x32xf32, #tpu.memory_space<vmem>>, vector<1x8x32xf32>,
    %154 = vector.extract_strided_slice %149 {offsets = [8, 0], sizes = [8, 32], strides = [1, 1]} : vector<16x32xf32> to vector<8x32xf32>
    %c1 = arith.constant 1 : index
    %c0_56 = arith.constant 0 : index
    %c0_57 = arith.constant 0 : index
    %155 = vector.load %arg9[%c1, %c0_56, %c0_57] : memref<2x8x32xf32, #tpu.memory_space<vmem>>, vector<1x8x32xf32>
    %156 = vector.shape_cast %155 : vector<1x8x32xf32> to vector<8x32xf32>
    %157 = vector.shape_cast %154 : vector<8x32xf32> to vector<1x8x32xf32>
    tpu.vector_store %arg9[%c1, %c0_56, %c0_57], %157 {strides = array<i32>} : memref<2x8x32xf32, #tpu.memory_space<vmem>>, vector<1x8x32xf32>,
    return
  }
  func.func @transform_0(%arg0: i32) -> (i32, i32, i32) {
    %c0_i32 = arith.constant 0 : i32
    %c0_i32_0 = arith.constant 0 : i32
    %c0_i32_1 = arith.constant 0 : i32
    return %arg0, %c0_i32, %c0_i32_0 : i32, i32, i32
  }
  func.func @transform_1(%arg0: i32) -> (i32, i32, i32) {
    %c0_i32 = arith.constant 0 : i32
    %c0_i32_0 = arith.constant 0 : i32
    %c0_i32_1 = arith.constant 0 : i32
    return %arg0, %c0_i32, %c0_i32_0 : i32, i32, i32
  }
  func.func @transform_2(%arg0: i32) -> (i32, i32, i32) {
    %c0_i32 = arith.constant 0 : i32
    %c0_i32_0 = arith.constant 0 : i32
    %c0_i32_1 = arith.constant 0 : i32
    return %arg0, %c0_i32, %c0_i32_0 : i32, i32, i32
  }
  func.func @transform_3(%arg0: i32) -> (i32, i32) {
    %c0_i32 = arith.constant 0 : i32
    %c0_i32_0 = arith.constant 0 : i32
    %c0_i32_1 = arith.constant 0 : i32
    return %c0_i32, %c0_i32_0 : i32, i32
  }
  func.func @transform_4(%arg0: i32) -> (i32, i32) {
    %c0_i32 = arith.constant 0 : i32
    %c0_i32_0 = arith.constant 0 : i32
    %c0_i32_1 = arith.constant 0 : i32
    return %c0_i32, %c0_i32_0 : i32, i32
  }
  func.func @transform_5(%arg0: i32) -> (i32, i32) {
    %c0_i32 = arith.constant 0 : i32
    %c0_i32_0 = arith.constant 0 : i32
    %c0_i32_1 = arith.constant 0 : i32
    return %c0_i32, %c0_i32_0 : i32, i32
  }
  func.func @transform_6(%arg0: i32) -> (i32, i32) {
    %c0_i32 = arith.constant 0 : i32
    %c0_i32_0 = arith.constant 0 : i32
    %c0_i32_1 = arith.constant 0 : i32
    return %c0_i32, %c0_i32_0 : i32, i32
  }
  func.func @transform_7(%arg0: i32) -> (i32, i32) {
    %c0_i32 = arith.constant 0 : i32
    %c0_i32_0 = arith.constant 0 : i32
    %c0_i32_1 = arith.constant 0 : i32
    return %c0_i32, %c0_i32_0 : i32, i32
  }
  func.func @transform_8(%arg0: i32) -> (i32, i32, i32) {
    %c0_i32 = arith.constant 0 : i32
    %c0_i32_0 = arith.constant 0 : i32
    %c0_i32_1 = arith.constant 0 : i32
    return %arg0, %c0_i32, %c0_i32_0 : i32, i32, i32
  }
}

</mosaic_0001>

<llo_original>
// kernel: multimodal_attention.1
$region0: #{multimodal_attention.1}
  #allocation0 [shape = 'u32[]', space=smem, size = 0x4, offset = 0x4, fixed_abs, tag = 'smem constant byte address 0x4 - core index']
  #allocation1 [shape = 'u32[144,128]{1,0:T(1,128)}', space=vmem, size = 0x12000, scoped, tag = 'internal scratch']
  %s0 = inlined_call_operand.vmem [shape: f32[4,8,32], index: 0, kind: input, shape index: {}]
  %s1 = inlined_call_operand.vmem [shape: f32[4,8,32], index: 1, kind: input, shape index: {}]
  %s2 = inlined_call_operand.vmem [shape: f32[4,8,32], index: 2, kind: input, shape index: {}]
  %s3 = inlined_call_operand.vmem [shape: f32[32,32], index: 3, kind: input, shape index: {}]
  %s4 = inlined_call_operand.vmem [shape: f32[32,64], index: 4, kind: input, shape index: {}]
  %s5 = inlined_call_operand.vmem [shape: f32[32,64], index: 5, kind: input, shape index: {}]
  %s6 = inlined_call_operand.vmem [shape: f32[32,32], index: 6, kind: input, shape index: {}]
  %s7 = inlined_call_operand.vmem [shape: f32[4,64], index: 7, kind: input, shape index: {}]
  %s8 = inlined_call_operand.hbm [shape: f32[4,8,32], index: 8, kind: output, shape index: {}]
  %s9 = sld [smem:[#allocation0]]
  $region65: #{multimodal_attention.1} parent=0
    _
  %s11 = ssub.s32 1, %s9
  %s12 = scalar_select 0, %s11, %s9
  $region1: #{multimodal_attention.1} parent=0
    #allocation2 [shape = 'u8[16384]{0}', space=vmem, size = 0x4000, scoped, tag = 'output window, operand 0']
    #allocation3 [shape = 's32[2]{0}', space=sflag, size = 0x8, scoped, tag = 'scoped memory for multimodal_attention.1']
    %13 = vsyncpa [#allocation3], 0
    %s14 = scalar_lea.sflag [#allocation3], 1
    %15 = vsyncpa %s14, 0
    loop: start=0, step=1, limit=4
    $region2: #{multimodal_attention.1} parent=1 // loop_pre_header
      _
    $region3: #{multimodal_attention.1} parent=1 // loop_header
      %s17 = sphi 0, %s21
      %p18 = scmp.ge.s32.totalorder %s17, 4
      %s27 = sphi 0, %s29
      %s30 = sphi 0, %s27
      %s31 = sphi 0, %s30
      %s47 = sphi 0, %s31
      %s53 = sphi 0, %s55
      %s56 = sphi 0, %s53
      %s57 = sphi 0, %s56
      %s73 = sphi 0, %s57
      %s79 = sphi 0, %s81
      %s82 = sphi 0, %s79
      %s83 = sphi 0, %s82
      %s99 = sphi 0, %s83
      %s103 = sphi 0, %s103
      %s105 = sphi 0, %s103
      %s106 = sphi 0, %s105
      %s120 = sphi 0, %s106
      %s124 = sphi 0, %s124
      %s126 = sphi 0, %s124
      %s127 = sphi 0, %s126
      %s141 = sphi 0, %s127
      %s145 = sphi 0, %s145
      %s147 = sphi 0, %s145
      %s148 = sphi 0, %s147
      %s162 = sphi 0, %s148
      %s166 = sphi 0, %s166
      %s168 = sphi 0, %s166
      %s169 = sphi 0, %s168
      %s183 = sphi 0, %s169
      %s187 = sphi 0, %s187
      %s189 = sphi 0, %s187
      %s190 = sphi 0, %s189
      %s204 = sphi 0, %s190
      %s210 = sphi 0, %s212
      %s213 = sphi 0, %s210
      %s214 = sphi 0, %s213
      %s230 = sphi 0, %s214
    $region4: #{multimodal_attention.1} parent=1 // loop_header_branch
      %20 = sbr.rel (%p18) target = $region8
    $region5: #{multimodal_attention.1} parent=1 // loop_body
      %s22 = ssub.s32 %s17, 1
      %s23 = ssub.s32 %s17, 2
      %s24 = sadd.s32 %s17, 1
      %s25 = ssub.s32 %s17, %s24
      %p26 = scmp.eq.s32.totalorder %s25, 0
      %s28 = sadd.s32 %s27, 1
      %s29 = scalar_select %p26, %s27, %s28
      %p32 = pneg %p26
      %p33 = scmp.eq.s32.totalorder %s17, 1
      %p34 = por %p32, %p33
      %p35 = scmp.ne.s32.totalorder %s27, %s30
      %p36 = scmp.eq.s32.totalorder %s17, 0
      %p37 = por %p35, %p36
      %p38 = scmp.ne.s32.totalorder %s27, %s30
      %p39 = scmp.eq.s32.totalorder %s22, 1
      %p40 = por %p38, %p39
      %p41 = scmp.ne.s32.totalorder %s30, %s31
      %p42 = scmp.eq.s32.totalorder %s22, 0
      %p43 = por %p41, %p42
      %p44 = scmp.ne.s32.totalorder %s30, %s31
      %p45 = scmp.eq.s32.totalorder %s23, 1
      %p46 = por %p44, %p45
      %p48 = scmp.ne.s32.totalorder %s31, %s47
      %p49 = scmp.eq.s32.totalorder %s23, 0
      %p50 = por %p48, %p49
      %s51 = ssub.s32 %s17, %s24
      %p52 = scmp.eq.s32.totalorder %s51, 0
      %s54 = sadd.s32 %s53, 1
      %s55 = scalar_select %p52, %s53, %s54
      %p58 = pneg %p52
      %p59 = scmp.eq.s32.totalorder %s17, 1
      %p60 = por %p58, %p59
      %p61 = scmp.ne.s32.totalorder %s53, %s56
      %p62 = scmp.eq.s32.totalorder %s17, 0
      %p63 = por %p61, %p62
      %p64 = scmp.ne.s32.totalorder %s53, %s56
      %p65 = scmp.eq.s32.totalorder %s22, 1
      %p66 = por %p64, %p65
      %p67 = scmp.ne.s32.totalorder %s56, %s57
      %p68 = scmp.eq.s32.totalorder %s22, 0
      %p69 = por %p67, %p68
      %p70 = scmp.ne.s32.totalorder %s56, %s57
      %p71 = scmp.eq.s32.totalorder %s23, 1
      %p72 = por %p70, %p71
      %p74 = scmp.ne.s32.totalorder %s57, %s73
      %p75 = scmp.eq.s32.totalorder %s23, 0
      %p76 = por %p74, %p75
      %s77 = ssub.s32 %s17, %s24
      %p78 = scmp.eq.s32.totalorder %s77, 0
      %s80 = sadd.s32 %s79, 1
      %s81 = scalar_select %p78, %s79, %s80
      %p84 = pneg %p78
      %p85 = scmp.eq.s32.totalorder %s17, 1
      %p86 = por %p84, %p85
      %p87 = scmp.ne.s32.totalorder %s79, %s82
      %p88 = scmp.eq.s32.totalorder %s17, 0
      %p89 = por %p87, %p88
      %p90 = scmp.ne.s32.totalorder %s79, %s82
      %p91 = scmp.eq.s32.totalorder %s22, 1
      %p92 = por %p90, %p91
      %p93 = scmp.ne.s32.totalorder %s82, %s83
      %p94 = scmp.eq.s32.totalorder %s22, 0
      %p95 = por %p93, %p94
      %p96 = scmp.ne.s32.totalorder %s82, %s83
      %p97 = scmp.eq.s32.totalorder %s23, 1
      %p98 = por %p96, %p97
      %p100 = scmp.ne.s32.totalorder %s83, %s99
      %p101 = scmp.eq.s32.totalorder %s23, 0
      %p102 = por %p100, %p101
      %s104 = sadd.s32 %s103, 1
      %p107 = scmp.eq.s32.totalorder %s17, 1
      %p108 = scmp.ne.s32.totalorder %s103, %s105
      %p109 = scmp.eq.s32.totalorder %s17, 0
      %p110 = por %p108, %p109
      %p111 = scmp.ne.s32.totalorder %s103, %s105
      %p112 = scmp.eq.s32.totalorder %s22, 1
      %p113 = por %p111, %p112
      %p114 = scmp.ne.s32.totalorder %s105, %s106
      %p115 = scmp.eq.s32.totalorder %s22, 0
      %p116 = por %p114, %p115
      %p117 = scmp.ne.s32.totalorder %s105, %s106
      %p118 = scmp.eq.s32.totalorder %s23, 1
      %p119 = por %p117, %p118
      %p121 = scmp.ne.s32.totalorder %s106, %s120
      %p122 = scmp.eq.s32.totalorder %s23, 0
      %p123 = por %p121, %p122
      %s125 = sadd.s32 %s124, 1
      %p128 = scmp.eq.s32.totalorder %s17, 1
      %p129 = scmp.ne.s32.totalorder %s124, %s126
      %p130 = scmp.eq.s32.totalorder %s17, 0
      %p131 = por %p129, %p130
      %p132 = scmp.ne.s32.totalorder %s124, %s126
      %p133 = scmp.eq.s32.totalorder %s22, 1
      %p134 = por %p132, %p133
      %p135 = scmp.ne.s32.totalorder %s126, %s127
      %p136 = scmp.eq.s32.totalorder %s22, 0
      %p137 = por %p135, %p136
      %p138 = scmp.ne.s32.totalorder %s126, %s127
      %p139 = scmp.eq.s32.totalorder %s23, 1
      %p140 = por %p138, %p139
      %p142 = scmp.ne.s32.totalorder %s127, %s141
      %p143 = scmp.eq.s32.totalorder %s23, 0
      %p144 = por %p142, %p143
      %s146 = sadd.s32 %s145, 1
      %p149 = scmp.eq.s32.totalorder %s17, 1
      %p150 = scmp.ne.s32.totalorder %s145, %s147
      %p151 = scmp.eq.s32.totalorder %s17, 0
      %p152 = por %p150, %p151
      %p153 = scmp.ne.s32.totalorder %s145, %s147
      %p154 = scmp.eq.s32.totalorder %s22, 1
      %p155 = por %p153, %p154
      %p156 = scmp.ne.s32.totalorder %s147, %s148
      %p157 = scmp.eq.s32.totalorder %s22, 0
      %p158 = por %p156, %p157
      %p159 = scmp.ne.s32.totalorder %s147, %s148
      %p160 = scmp.eq.s32.totalorder %s23, 1
      %p161 = por %p159, %p160
      %p163 = scmp.ne.s32.totalorder %s148, %s162
      %p164 = scmp.eq.s32.totalorder %s23, 0
      %p165 = por %p163, %p164
      %s167 = sadd.s32 %s166, 1
      %p170 = scmp.eq.s32.totalorder %s17, 1
      %p171 = scmp.ne.s32.totalorder %s166, %s168
      %p172 = scmp.eq.s32.totalorder %s17, 0
      %p173 = por %p171, %p172
      %p174 = scmp.ne.s32.totalorder %s166, %s168
      %p175 = scmp.eq.s32.totalorder %s22, 1
      %p176 = por %p174, %p175
      %p177 = scmp.ne.s32.totalorder %s168, %s169
      %p178 = scmp.eq.s32.totalorder %s22, 0
      %p179 = por %p177, %p178
      %p180 = scmp.ne.s32.totalorder %s168, %s169
      %p181 = scmp.eq.s32.totalorder %s23, 1
      %p182 = por %p180, %p181
      %p184 = scmp.ne.s32.totalorder %s169, %s183
      %p185 = scmp.eq.s32.totalorder %s23, 0
      %p186 = por %p184, %p185
      %s188 = sadd.s32 %s187, 1
      %p191 = scmp.eq.s32.totalorder %s17, 1
      %p192 = scmp.ne.s32.totalorder %s187, %s189
      %p193 = scmp.eq.s32.totalorder %s17, 0
      %p194 = por %p192, %p193
      %p195 = scmp.ne.s32.totalorder %s187, %s189
      %p196 = scmp.eq.s32.totalorder %s22, 1
      %p197 = por %p195, %p196
      %p198 = scmp.ne.s32.totalorder %s189, %s190
      %p199 = scmp.eq.s32.totalorder %s22, 0
      %p200 = por %p198, %p199
      %p201 = scmp.ne.s32.totalorder %s189, %s190
      %p202 = scmp.eq.s32.totalorder %s23, 1
      %p203 = por %p201, %p202
      %p205 = scmp.ne.s32.totalorder %s190, %s204
      %p206 = scmp.eq.s32.totalorder %s23, 0
      %p207 = por %p205, %p206
      %s208 = ssub.s32 %s17, %s24
      %p209 = scmp.eq.s32.totalorder %s208, 0
      %s211 = sadd.s32 %s210, 1
      %s212 = scalar_select %p209, %s210, %s211
      %p215 = pneg %p209
      %p216 = scmp.eq.s32.totalorder %s17, 1
      %p217 = por %p215, %p216
      %p218 = scmp.ne.s32.totalorder %s210, %s213
      %p219 = scmp.eq.s32.totalorder %s17, 0
      %p220 = por %p218, %p219
      %p221 = scmp.ne.s32.totalorder %s210, %s213
      %p222 = scmp.eq.s32.totalorder %s22, 1
      %p223 = por %p221, %p222
      %p224 = scmp.ne.s32.totalorder %s213, %s214
      %p225 = scmp.eq.s32.totalorder %s22, 0
      %p226 = por %p224, %p225
      %p227 = scmp.ne.s32.totalorder %s213, %s214
      %p228 = scmp.eq.s32.totalorder %s23, 1
      %p229 = por %p227, %p228
      %p231 = scmp.ne.s32.totalorder %s214, %s230
      %p232 = scmp.eq.s32.totalorder %s23, 0
      %p233 = por %p231, %p232
      %p234 = scmp.le.s32.totalorder 1, %s17
      %p235 = scmp.lt.s32.totalorder %s17, 3
      %p236 = pnand %p234, %p235
      %p237 = pneg %p236
      // Predicated region
      $region9: #{multimodal_attention.1} parent=5 // pred_check
        _
      $region10: #{multimodal_attention.1} parent=5 // pred_check_branch
        %239 = sbr.rel (%p236) target = $region12
      $region11: #{multimodal_attention.1} parent=5 // pred_region
        %s240 = ssub.s32 %s17, 1
        // Predicated region
        $region13: #{multimodal_attention.1} parent=11 // pred_check
          %p241 = pneg %p116
        $region14: #{multimodal_attention.1} parent=11 // pred_check_branch
          %243 = sbr.rel (%p241) target = $region16
        $region15: #{multimodal_attention.1} parent=11 // pred_region
          _
        $region16: #{multimodal_attention.1} parent=11 // pred_fallthru
          _
        // Predicated region
        $region17: #{multimodal_attention.1} parent=11 // pred_check
          %p244 = pneg %p137
        $region18: #{multimodal_attention.1} parent=11 // pred_check_branch
          %246 = sbr.rel (%p244) target = $region20
        $region19: #{multimodal_attention.1} parent=11 // pred_region
          _
        $region20: #{multimodal_attention.1} parent=11 // pred_fallthru
          _
        // Predicated region
        $region21: #{multimodal_attention.1} parent=11 // pred_check
          %p247 = pneg %p158
        $region22: #{multimodal_attention.1} parent=11 // pred_check_branch
          %249 = sbr.rel (%p247) target = $region24
        $region23: #{multimodal_attention.1} parent=11 // pred_region
          _
        $region24: #{multimodal_attention.1} parent=11 // pred_fallthru
          _
        // Predicated region
        $region25: #{multimodal_attention.1} parent=11 // pred_check
          %p250 = pneg %p179
        $region26: #{multimodal_attention.1} parent=11 // pred_check_branch
          %252 = sbr.rel (%p250) target = $region28
        $region27: #{multimodal_attention.1} parent=11 // pred_region
          _
        $region28: #{multimodal_attention.1} parent=11 // pred_fallthru
          _
        // Predicated region
        $region29: #{multimodal_attention.1} parent=11 // pred_check
          %p253 = pneg %p200
        $region30: #{multimodal_attention.1} parent=11 // pred_check_branch
          %255 = sbr.rel (%p253) target = $region32
        $region31: #{multimodal_attention.1} parent=11 // pred_region
          _
        $region32: #{multimodal_attention.1} parent=11 // pred_fallthru
          _
      $region12: #{multimodal_attention.1} parent=5 // pred_fallthru
        _
      %p256 = scmp.lt.s32.totalorder %s17, 2
      // Predicated region
      $region33: #{multimodal_attention.1} parent=5 // pred_check
        %p257 = pneg %p256
      $region34: #{multimodal_attention.1} parent=5 // pred_check_branch
        %259 = sbr.rel (%p257) target = $region36
      $region35: #{multimodal_attention.1} parent=5 // pred_region
        // Predicated region
        $region37: #{multimodal_attention.1} parent=35 // pred_check
          %p260 = pneg %p37
        $region38: #{multimodal_attention.1} parent=35 // pred_check_branch
          %262 = sbr.rel (%p260) target = $region40
        $region39: #{multimodal_attention.1} parent=35 // pred_region
          %s263 = smul.u32 2, %s17
          %p264 = scmp.lt.s32.totalorder %s263, 3
          %s265 = scalar_select %p264, %s263, 3
          %s266 = smul.addr %s265, 8
          %s267 = scalar_lea.vmem %s0, %s266
          %s268 = smul.u32 2, %s17
        $region40: #{multimodal_attention.1} parent=35 // pred_fallthru
          _
        // Predicated region
        $region41: #{multimodal_attention.1} parent=35 // pred_check
          %p269 = pneg %p63
        $region42: #{multimodal_attention.1} parent=35 // pred_check_branch
          %271 = sbr.rel (%p269) target = $region44
        $region43: #{multimodal_attention.1} parent=35 // pred_region
          %s272 = smul.u32 2, %s17
          %p273 = scmp.lt.s32.totalorder %s272, 3
          %s274 = scalar_select %p273, %s272, 3
          %s275 = smul.addr %s274, 8
          %s276 = scalar_lea.vmem %s1, %s275
          %s277 = smul.u32 2, %s17
        $region44: #{multimodal_attention.1} parent=35 // pred_fallthru
          _
        // Predicated region
        $region45: #{multimodal_attention.1} parent=35 // pred_check
          %p278 = pneg %p89
        $region46: #{multimodal_attention.1} parent=35 // pred_check_branch
          %280 = sbr.rel (%p278) target = $region48
        $region47: #{multimodal_attention.1} parent=35 // pred_region
          %s281 = smul.u32 2, %s17
          %p282 = scmp.lt.s32.totalorder %s281, 3
          %s283 = scalar_select %p282, %s281, 3
          %s284 = smul.addr %s283, 8
          %s285 = scalar_lea.vmem %s2, %s284
          %s286 = smul.u32 2, %s17
        $region48: #{multimodal_attention.1} parent=35 // pred_fallthru
          _
      $region36: #{multimodal_attention.1} parent=5 // pred_fallthru
        _
      %p287 = scmp.le.s32.totalorder 1, %s17
      %p288 = scmp.lt.s32.totalorder %s17, 3
      %p289 = pnand %p287, %p288
      %p290 = pneg %p289
      // Predicated region
      $region49: #{multimodal_attention.1} parent=5 // pred_check
        _
      $region50: #{multimodal_attention.1} parent=5 // pred_check_branch
        %292 = sbr.rel (%p289) target = $region52
      $region51: #{multimodal_attention.1} parent=5 // pred_region
        %s293 = ssub.s32 %s17, 1
        %s294 = smul.u32 2, %s22
        %p295 = scmp.lt.s32.totalorder %s294, 3
        %s296 = scalar_select %p295, %s294, 3
        %s297 = smul.addr %s296, 8
        %s298 = scalar_lea.vmem %s0, %s297
        %p299 = pneg %p43
        %p300 = pneg %p40
        %s301 = smul.u32 2, %s22
        %p302 = scmp.lt.s32.totalorder %s301, 3
        %s303 = scalar_select %p302, %s301, 3
        %s304 = smul.addr %s303, 8
        %s305 = scalar_lea.vmem %s1, %s304
        %p306 = pneg %p69
        %p307 = pneg %p66
        %s308 = smul.u32 2, %s22
        %p309 = scmp.lt.s32.totalorder %s308, 3
        %s310 = scalar_select %p309, %s308, 3
        %s311 = smul.addr %s310, 8
        %s312 = scalar_lea.vmem %s2, %s311
        %p313 = pneg %p95
        %p314 = pneg %p92
        %p315 = pneg %p116
        %p316 = pneg %p113
        %p317 = pneg %p137
        %p318 = pneg %p134
        %p319 = pneg %p158
        %p320 = pneg %p155
        %p321 = pneg %p179
        %p322 = pneg %p176
        %p323 = pneg %p200
        %p324 = pneg %p197
        %p325 = pneg %p226
        %p326 = pneg %p223
        %s327 = sand.u32 %s213, 1
        %s328 = scalar_lea.sflag [#allocation3], %s327
        %s329 = sand.u32 %s213, 1
        %s330 = smul.addr %s329, 16
        %s331 = scalar_lea.vmem [#allocation2], %s330
        %s332 = smul.u32 2, %s22
        %p333 = scmp.lt.s32.totalorder %s332, 3
        %s334 = scalar_select %p333, %s332, 3
        %s335 = smul.addr %s334, 8
        %s336 = scalar_lea.vmem %s0, %s335
        %s337 = smul.u32 2, %s22
        %s338 = smul.u32 2, %s22
        %p339 = scmp.lt.s32.totalorder %s338, 3
        %s340 = scalar_select %p339, %s338, 3
        %s341 = smul.addr %s340, 8
        %s342 = scalar_lea.vmem %s1, %s341
        %s343 = smul.u32 2, %s22
        %s344 = smul.u32 2, %s22
        %p345 = scmp.lt.s32.totalorder %s344, 3
        %s346 = scalar_select %p345, %s344, 3
        %s347 = smul.addr %s346, 8
        %s348 = scalar_lea.vmem %s2, %s347
        %s349 = smul.u32 2, %s22
        %s350 = smul.u32 2, %s22
        %v351 = vld [vmem:[%s7] sm:$0xf]
        %v352 = vld [vmem:[%s336] sm:$0xff]
        %v353 = vld [vmem:[%s336 + $0x8] sm:$0xff]
        %v354 = vld [vmem:[%s342] sm:$0xff]
        %v355 = vld [vmem:[%s342 + $0x8] sm:$0xff]
        %v356 = vld [vmem:[%s348] sm:$0xff]
        %v357 = vld [vmem:[%s348 + $0x8] sm:$0xff]
        %v358 = vld [vmem:[%s3] sm:$0xff]
        %v359 = vld [vmem:[%s3 + $0x8] sm:$0xff]
        %v360 = vld [vmem:[%s3 + $0x10] sm:$0xff]
        %v361 = vld [vmem:[%s3 + $0x18] sm:$0xff]
        %v362 = vlaneseq
        %v363 = vshrl.u32 %v362, 7
        %v364 = vsub.s32 0, %v363
        %v365 = vrot.slane %v351, %v364
        %vm366 = vcmask 261120
        %v368 = vsel %vm366, %v352, 0
        %v371 = vsel %vm366, %v353, 0
        %373 = vmatprep.subr.mxu0 0.0
        %374 = vmatpush1.msra.mxu0 0.0
        %375 = vmatprep.subr.mxu0 0.0
        %376 = vmatpush1.msra.mxu0 0.0
        %377 = vmatprep.subr.mxu0 0.0
        %378 = vmatpush1.msra.mxu0 0.0
        %379 = vmatprep.subr.mxu0 0.0
        %380 = vmatpush1.msra.mxu0 0.0
        %381 = vmatprep.subr.mxu0 0.0
        %382 = vmatpush1.msra.mxu0 0.0
        %383 = vmatprep.subr.mxu0 0.0
        %384 = vmatpush1.msra.mxu0 0.0
        %385 = vmatprep.subr.mxu0 0.0
        %386 = vmatpush1.msra.mxu0 0.0
        %387 = vmatprep.subr.mxu0 0.0
        %388 = vmatpush1.msra.mxu0 0.0
        %389 = vmatprep.subr.mxu0 0.0
        %390 = vmatpush1.msra.mxu0 0.0
        %391 = vmatprep.subr.mxu0 0.0
        %392 = vmatpush1.msra.mxu0 0.0
        %393 = vmatprep.subr.mxu0 0.0
        %394 = vmatpush1.msra.mxu0 0.0
        %395 = vmatprep.subr.mxu0 0.0
        %396 = vmatpush1.msra.mxu0 0.0
        %397 = vmatprep.subr.mxu0 0.0
        %398 = vmatpush1.msra.mxu0 %v361
        %399 = vmatprep.subr.mxu0 0.0
        %400 = vmatpush1.msra.mxu0 %v360
        %401 = vmatprep.subr.mxu0 0.0
        %402 = vmatpush1.msra.mxu0 %v359
        %403 = vmatprep.subr.mxu0 0.0
        %404 = vmatpush1.msra.mxu0 %v358
        %405 = vmatprep.subr.mxu0 0.0
        %406 = vmatpush2.msra.mxu0 0.0
        %407 = vmatprep.subr.mxu0 0.0
        %408 = vmatpush2.msra.mxu0 0.0
        %409 = vmatprep.subr.mxu0 0.0
        %410 = vmatpush2.msra.mxu0 0.0
        %411 = vmatprep.subr.mxu0 0.0
        %412 = vmatpush2.msra.mxu0 0.0
        %413 = vmatprep.subr.mxu0 0.0
        %414 = vmatpush2.msra.mxu0 0.0
        %415 = vmatprep.subr.mxu0 0.0
        %416 = vmatpush2.msra.mxu0 0.0
        %417 = vmatprep.subr.mxu0 0.0
        %418 = vmatpush2.msra.mxu0 0.0
        %419 = vmatprep.subr.mxu0 0.0
        %420 = vmatpush2.msra.mxu0 0.0
        %421 = vmatprep.subr.mxu0 0.0
        %422 = vmatpush2.msra.mxu0 0.0
        %423 = vmatprep.subr.mxu0 0.0
        %424 = vmatpush2.msra.mxu0 0.0
        %425 = vmatprep.subr.mxu0 0.0
        %426 = vmatpush2.msra.mxu0 0.0
        %427 = vmatprep.subr.mxu0 0.0
        %428 = vmatpush2.msra.mxu0 0.0
        %429 = vmatprep.subr.mxu0 0.0
        %430 = vmatpush2.msra.mxu0 0.0
        %431 = vmatprep.subr.mxu0 0.0
        %432 = vmatpush2.msra.mxu0 0.0
        %433 = vmatprep.subr.mxu0 0.0
        %434 = vmatpush2.msra.mxu0 0.0
        %435 = vmatprep.subr.mxu0 0.0
        %436 = vmatpush2.msra.mxu0 0.0
        %437 = vmatprep.mubr.f32.mxu0 0.0
        %438 = vmatmul.mubr.f32.gmra.mxu0 %v368
        %v439 = vpop.f32.mrf.mxu0
        %v440 = vadd.f32 %v365, %v439
        %v441 = vpop.f32.mrf.mxu0
        %442 = vmatprep.mubr.f32.mxu0 0.0
        %443 = vmatmul.mubr.f32.gmra.mxu0 %v371
        %v444 = vpop.f32.mrf.mxu0
        %v445 = vadd.f32 %v365, %v444
        %v446 = vpop.f32.mrf.mxu0
        %447 = vdwg.mxu0
        %v448 = vld [vmem:[%s4] sm:$0xff]
        %v449 = vld [vmem:[%s4 + $0x8] sm:$0xff]
        %v450 = vld [vmem:[%s4 + $0x10] sm:$0xff]
        %v451 = vld [vmem:[%s4 + $0x18] sm:$0xff]
        %v452 = vlaneseq
        %v453 = vshrl.u32 %v452, 7
        %v454 = vsub.s32 1, %v453
        %v455 = vrot.slane %v351, %v454
        %v457 = vsel %vm366, %v354, 0
        %v460 = vsel %vm366, %v355, 0
        %462 = vmatprep.subr.mxu0 0.0
        %463 = vmatpush1.msra.mxu0 0.0
        %464 = vmatprep.subr.mxu0 0.0
        %465 = vmatpush1.msra.mxu0 0.0
        %466 = vmatprep.subr.mxu0 0.0
        %467 = vmatpush1.msra.mxu0 0.0
        %468 = vmatprep.subr.mxu0 0.0
        %469 = vmatpush1.msra.mxu0 0.0
        %470 = vmatprep.subr.mxu0 0.0
        %471 = vmatpush1.msra.mxu0 0.0
        %472 = vmatprep.subr.mxu0 0.0
        %473 = vmatpush1.msra.mxu0 0.0
        %474 = vmatprep.subr.mxu0 0.0
        %475 = vmatpush1.msra.mxu0 0.0
        %476 = vmatprep.subr.mxu0 0.0
        %477 = vmatpush1.msra.mxu0 0.0
        %478 = vmatprep.subr.mxu0 0.0
        %479 = vmatpush1.msra.mxu0 0.0
        %480 = vmatprep.subr.mxu0 0.0
        %481 = vmatpush1.msra.mxu0 0.0
        %482 = vmatprep.subr.mxu0 0.0
        %483 = vmatpush1.msra.mxu0 0.0
        %484 = vmatprep.subr.mxu0 0.0
        %485 = vmatpush1.msra.mxu0 0.0
        %486 = vmatprep.subr.mxu0 0.0
        %487 = vmatpush1.msra.mxu0 %v451
        %488 = vmatprep.subr.mxu0 0.0
        %489 = vmatpush1.msra.mxu0 %v450
        %490 = vmatprep.subr.mxu0 0.0
        %491 = vmatpush1.msra.mxu0 %v449
        %492 = vmatprep.subr.mxu0 0.0
        %493 = vmatpush1.msra.mxu0 %v448
        %494 = vmatprep.subr.mxu0 0.0
        %495 = vmatpush2.msra.mxu0 0.0
        %496 = vmatprep.subr.mxu0 0.0
        %497 = vmatpush2.msra.mxu0 0.0
        %498 = vmatprep.subr.mxu0 0.0
        %499 = vmatpush2.msra.mxu0 0.0
        %500 = vmatprep.subr.mxu0 0.0
        %501 = vmatpush2.msra.mxu0 0.0
        %502 = vmatprep.subr.mxu0 0.0
        %503 = vmatpush2.msra.mxu0 0.0
        %504 = vmatprep.subr.mxu0 0.0
        %505 = vmatpush2.msra.mxu0 0.0
        %506 = vmatprep.subr.mxu0 0.0
        %507 = vmatpush2.msra.mxu0 0.0
        %508 = vmatprep.subr.mxu0 0.0
        %509 = vmatpush2.msra.mxu0 0.0
        %510 = vmatprep.subr.mxu0 0.0
        %511 = vmatpush2.msra.mxu0 0.0
        %512 = vmatprep.subr.mxu0 0.0
        %513 = vmatpush2.msra.mxu0 0.0
        %514 = vmatprep.subr.mxu0 0.0
        %515 = vmatpush2.msra.mxu0 0.0
        %516 = vmatprep.subr.mxu0 0.0
        %517 = vmatpush2.msra.mxu0 0.0
        %518 = vmatprep.subr.mxu0 0.0
        %519 = vmatpush2.msra.mxu0 0.0
        %520 = vmatprep.subr.mxu0 0.0
        %521 = vmatpush2.msra.mxu0 0.0
        %522 = vmatprep.subr.mxu0 0.0
        %523 = vmatpush2.msra.mxu0 0.0
        %524 = vmatprep.subr.mxu0 0.0
        %525 = vmatpush2.msra.mxu0 0.0
        %526 = vmatprep.mubr.f32.mxu0 0.0
        %527 = vmatmul.mubr.f32.gmra.mxu0 %v457
        %v528 = vpop.f32.mrf.mxu0
        %v529 = vadd.f32 %v455, %v528
        %v530 = vpop.f32.mrf.mxu0
        %531 = vmatprep.mubr.f32.mxu0 0.0
        %532 = vmatmul.mubr.f32.gmra.mxu0 %v460
        %v533 = vpop.f32.mrf.mxu0
        %v534 = vadd.f32 %v455, %v533
        %v535 = vpop.f32.mrf.mxu0
        %536 = vdwg.mxu0
        %v537 = vld [vmem:[%s5] sm:$0xff]
        %v538 = vld [vmem:[%s5 + $0x8] sm:$0xff]
        %v539 = vld [vmem:[%s5 + $0x10] sm:$0xff]
        %v540 = vld [vmem:[%s5 + $0x18] sm:$0xff]
        %v541 = vlaneseq
        %v542 = vshrl.u32 %v541, 7
        %v543 = vsub.s32 2, %v542
        %v544 = vrot.slane %v351, %v543
        %v546 = vsel %vm366, %v356, 0
        %v549 = vsel %vm366, %v357, 0
        %551 = vmatprep.subr.mxu0 0.0
        %552 = vmatpush1.msra.mxu0 0.0
        %553 = vmatprep.subr.mxu0 0.0
        %554 = vmatpush1.msra.mxu0 0.0
        %555 = vmatprep.subr.mxu0 0.0
        %556 = vmatpush1.msra.mxu0 0.0
        %557 = vmatprep.subr.mxu0 0.0
        %558 = vmatpush1.msra.mxu0 0.0
        %559 = vmatprep.subr.mxu0 0.0
        %560 = vmatpush1.msra.mxu0 0.0
        %561 = vmatprep.subr.mxu0 0.0
        %562 = vmatpush1.msra.mxu0 0.0
        %563 = vmatprep.subr.mxu0 0.0
        %564 = vmatpush1.msra.mxu0 0.0
        %565 = vmatprep.subr.mxu0 0.0
        %566 = vmatpush1.msra.mxu0 0.0
        %567 = vmatprep.subr.mxu0 0.0
        %568 = vmatpush1.msra.mxu0 0.0
        %569 = vmatprep.subr.mxu0 0.0
        %570 = vmatpush1.msra.mxu0 0.0
        %571 = vmatprep.subr.mxu0 0.0
        %572 = vmatpush1.msra.mxu0 0.0
        %573 = vmatprep.subr.mxu0 0.0
        %574 = vmatpush1.msra.mxu0 0.0
        %575 = vmatprep.subr.mxu0 0.0
        %576 = vmatpush1.msra.mxu0 %v540
        %577 = vmatprep.subr.mxu0 0.0
        %578 = vmatpush1.msra.mxu0 %v539
        %579 = vmatprep.subr.mxu0 0.0
        %580 = vmatpush1.msra.mxu0 %v538
        %581 = vmatprep.subr.mxu0 0.0
        %582 = vmatpush1.msra.mxu0 %v537
        %583 = vmatprep.subr.mxu0 0.0
        %584 = vmatpush2.msra.mxu0 0.0
        %585 = vmatprep.subr.mxu0 0.0
        %586 = vmatpush2.msra.mxu0 0.0
        %587 = vmatprep.subr.mxu0 0.0
        %588 = vmatpush2.msra.mxu0 0.0
        %589 = vmatprep.subr.mxu0 0.0
        %590 = vmatpush2.msra.mxu0 0.0
        %591 = vmatprep.subr.mxu0 0.0
        %592 = vmatpush2.msra.mxu0 0.0
        %593 = vmatprep.subr.mxu0 0.0
        %594 = vmatpush2.msra.mxu0 0.0
        %595 = vmatprep.subr.mxu0 0.0
        %596 = vmatpush2.msra.mxu0 0.0
        %597 = vmatprep.subr.mxu0 0.0
        %598 = vmatpush2.msra.mxu0 0.0
        %599 = vmatprep.subr.mxu0 0.0
        %600 = vmatpush2.msra.mxu0 0.0
        %601 = vmatprep.subr.mxu0 0.0
        %602 = vmatpush2.msra.mxu0 0.0
        %603 = vmatprep.subr.mxu0 0.0
        %604 = vmatpush2.msra.mxu0 0.0
        %605 = vmatprep.subr.mxu0 0.0
        %606 = vmatpush2.msra.mxu0 0.0
        %607 = vmatprep.subr.mxu0 0.0
        %608 = vmatpush2.msra.mxu0 0.0
        %609 = vmatprep.subr.mxu0 0.0
        %610 = vmatpush2.msra.mxu0 0.0
        %611 = vmatprep.subr.mxu0 0.0
        %612 = vmatpush2.msra.mxu0 0.0
        %613 = vmatprep.subr.mxu0 0.0
        %614 = vmatpush2.msra.mxu0 0.0
        %615 = vmatprep.mubr.f32.mxu0 0.0
        %616 = vmatmul.mubr.f32.gmra.mxu0 %v546
        %v617 = vpop.f32.mrf.mxu0
        %v618 = vadd.f32 %v544, %v617
        %v619 = vpop.f32.mrf.mxu0
        %620 = vmatprep.mubr.f32.mxu0 0.0
        %621 = vmatmul.mubr.f32.gmra.mxu0 %v549
        %v622 = vpop.f32.mrf.mxu0
        %v623 = vadd.f32 %v544, %v622
        %v624 = vpop.f32.mrf.mxu0
        %625 = vdwg.mxu0
        %vm626 = vcmask 64512
        %v628 = vsel %vm626, %v440, 0
        %v631 = vsel %vm626, %v529, 0
        %v634 = vsel %vm626, %v618, 0
        %636 = vmatprep.subr.mxu0 0.0
        %637 = vmatpush1.xpose.msra.mxu0 0.0
        %638 = vmatprep.subr.mxu0 0.0
        %639 = vmatpush1.xpose.msra.mxu0 0.0
        %640 = vmatprep.subr.mxu0 0.0
        %641 = vmatpush1.xpose.msra.mxu0 0.0
        %642 = vmatprep.subr.mxu0 0.0
        %643 = vmatpush1.xpose.msra.mxu0 0.0
        %644 = vmatprep.subr.mxu0 0.0
        %645 = vmatpush1.xpose.msra.mxu0 0.0
        %646 = vmatprep.subr.mxu0 0.0
        %647 = vmatpush1.xpose.msra.mxu0 0.0
        %648 = vmatprep.subr.mxu0 0.0
        %649 = vmatpush1.xpose.msra.mxu0 0.0
        %650 = vmatprep.subr.mxu0 0.0
        %651 = vmatpush1.xpose.msra.mxu0 0.0
        %652 = vmatprep.subr.mxu0 0.0
        %653 = vmatpush1.xpose.msra.mxu0 0.0
        %654 = vmatprep.subr.mxu0 0.0
        %655 = vmatpush1.xpose.msra.mxu0 0.0
        %656 = vmatprep.subr.mxu0 0.0
        %657 = vmatpush1.xpose.msra.mxu0 0.0
        %658 = vmatprep.subr.mxu0 0.0
        %659 = vmatpush1.xpose.msra.mxu0 0.0
        %660 = vmatprep.subr.mxu0 0.0
        %661 = vmatpush1.xpose.msra.mxu0 0.0
        %662 = vmatprep.subr.mxu0 0.0
        %663 = vmatpush1.xpose.msra.mxu0 0.0
        %664 = vmatprep.subr.mxu0 0.0
        %665 = vmatpush1.xpose.msra.mxu0 %v634
        %666 = vmatprep.subr.mxu0 0.0
        %667 = vmatpush1.xpose.msra.mxu0 %v631
        %668 = vmatprep.subr.mxu0 0.0
        %669 = vmatpush2.xpose.msra.mxu0 0.0
        %670 = vmatprep.subr.mxu0 0.0
        %671 = vmatpush2.xpose.msra.mxu0 0.0
        %672 = vmatprep.subr.mxu0 0.0
        %673 = vmatpush2.xpose.msra.mxu0 0.0
        %674 = vmatprep.subr.mxu0 0.0
        %675 = vmatpush2.xpose.msra.mxu0 0.0
        %676 = vmatprep.subr.mxu0 0.0
        %677 = vmatpush2.xpose.msra.mxu0 0.0
        %678 = vmatprep.subr.mxu0 0.0
        %679 = vmatpush2.xpose.msra.mxu0 0.0
        %680 = vmatprep.subr.mxu0 0.0
        %681 = vmatpush2.xpose.msra.mxu0 0.0
        %682 = vmatprep.subr.mxu0 0.0
        %683 = vmatpush2.xpose.msra.mxu0 0.0
        %684 = vmatprep.subr.mxu0 0.0
        %685 = vmatpush2.xpose.msra.mxu0 0.0
        %686 = vmatprep.subr.mxu0 0.0
        %687 = vmatpush2.xpose.msra.mxu0 0.0
        %688 = vmatprep.subr.mxu0 0.0
        %689 = vmatpush2.xpose.msra.mxu0 0.0
        %690 = vmatprep.subr.mxu0 0.0
        %691 = vmatpush2.xpose.msra.mxu0 0.0
        %692 = vmatprep.subr.mxu0 0.0
        %693 = vmatpush2.xpose.msra.mxu0 0.0
        %694 = vmatprep.subr.mxu0 0.0
        %695 = vmatpush2.xpose.msra.mxu0 0.0
        %696 = vmatprep.subr.mxu0 0.0
        %697 = vmatpush2.xpose.msra.mxu0 0.0
        %698 = vmatprep.subr.mxu0 0.0
        %699 = vmatpush2.xpose.msra.mxu0 0.0
        %700 = vmatprep.mubr.f32.mxu0 0.0
        %701 = vmatmul.mubr.f32.gmra.mxu0 %v628
        %v702 = vpop.f32.mrf.mxu0
        %v703 = vadd.f32 0.0, %v702
        %v704 = vpop.f32.mrf.mxu0
        %705 = vdwg.mxu0
        %vm706 = vcmask 130048
        %v707 = vsel %vm706, %v703, -inf
        %708 = vmax.xlane.f32.xlu0 %v707
        %v709 = vpop.xlane.xlu0 %708
        %v710 = vsub.f32 %v703, %v709
        %v711 = vmul.f32 %v710, 1.442695
        %v712 = vpow.pop %v711
        %v713 = vsel %vm706, %v712, 0.0
        %714 = vadd.xlane.f32.xlu0 %v713
        %v715 = vpop.xlane.xlu0 %714
        %v716 = vrcp.pop %v715
        %v717 = vmul.f32 %v712, %v716
        %718 = vrot.lane.b32.xlu0 %v529, 96
        %v719 = vpop.permute.xlu0 %718
        %720 = vrot.lane.b32.xlu0 %v618, 96
        %v721 = vpop.permute.xlu0 %720
        %v725 = vsel %vm706, %v717, 0
        %727 = vmatprep.subr.mxu0 0.0
        %728 = vmatpush1.msra.mxu0 0.0
        %729 = vmatprep.subr.mxu0 0.0
        %730 = vmatpush1.msra.mxu0 0.0
        %731 = vmatprep.subr.mxu0 0.0
        %732 = vmatpush1.msra.mxu0 0.0
        %733 = vmatprep.subr.mxu0 0.0
        %734 = vmatpush1.msra.mxu0 0.0
        %735 = vmatprep.subr.mxu0 0.0
        %736 = vmatpush1.msra.mxu0 0.0
        %737 = vmatprep.subr.mxu0 0.0
        %738 = vmatpush1.msra.mxu0 0.0
        %739 = vmatprep.subr.mxu0 0.0
        %740 = vmatpush1.msra.mxu0 0.0
        %741 = vmatprep.subr.mxu0 0.0
        %742 = vmatpush1.msra.mxu0 0.0
        %743 = vmatprep.subr.mxu0 0.0
        %744 = vmatpush1.msra.mxu0 0.0
        %745 = vmatprep.subr.mxu0 0.0
        %746 = vmatpush1.msra.mxu0 0.0
        %747 = vmatprep.subr.mxu0 0.0
        %748 = vmatpush1.msra.mxu0 0.0
        %749 = vmatprep.subr.mxu0 0.0
        %750 = vmatpush1.msra.mxu0 0.0
        %751 = vmatprep.subr.mxu0 0.0
        %752 = vmatpush1.msra.mxu0 0.0
        %753 = vmatprep.subr.mxu0 0.0
        %754 = vmatpush1.msra.mxu0 0.0
        %755 = vmatprep.subr.mxu0 0.0
        %756 = vmatpush1.msra.mxu0 %v721
        %757 = vmatprep.subr.mxu0 0.0
        %758 = vmatpush1.msra.mxu0 %v719
        %759 = vmatprep.subr.mxu0 0.0
        %760 = vmatpush2.msra.mxu0 0.0
        %761 = vmatprep.subr.mxu0 0.0
        %762 = vmatpush2.msra.mxu0 0.0
        %763 = vmatprep.subr.mxu0 0.0
        %764 = vmatpush2.msra.mxu0 0.0
        %765 = vmatprep.subr.mxu0 0.0
        %766 = vmatpush2.msra.mxu0 0.0
        %767 = vmatprep.subr.mxu0 0.0
        %768 = vmatpush2.msra.mxu0 0.0
        %769 = vmatprep.subr.mxu0 0.0
        %770 = vmatpush2.msra.mxu0 0.0
        %771 = vmatprep.subr.mxu0 0.0
        %772 = vmatpush2.msra.mxu0 0.0
        %773 = vmatprep.subr.mxu0 0.0
        %774 = vmatpush2.msra.mxu0 0.0
        %775 = vmatprep.subr.mxu0 0.0
        %776 = vmatpush2.msra.mxu0 0.0
        %777 = vmatprep.subr.mxu0 0.0
        %778 = vmatpush2.msra.mxu0 0.0
        %779 = vmatprep.subr.mxu0 0.0
        %780 = vmatpush2.msra.mxu0 0.0
        %781 = vmatprep.subr.mxu0 0.0
        %782 = vmatpush2.msra.mxu0 0.0
        %783 = vmatprep.subr.mxu0 0.0
        %784 = vmatpush2.msra.mxu0 0.0
        %785 = vmatprep.subr.mxu0 0.0
        %786 = vmatpush2.msra.mxu0 0.0
        %787 = vmatprep.subr.mxu0 0.0
        %788 = vmatpush2.msra.mxu0 0.0
        %789 = vmatprep.subr.mxu0 0.0
        %790 = vmatpush2.msra.mxu0 0.0
        %791 = vmatprep.mubr.f32.mxu0 0.0
        %792 = vmatmul.mubr.f32.gmra.mxu0 %v725
        %v793 = vpop.f32.mrf.mxu0
        %v794 = vadd.f32 0.0, %v793
        %v795 = vpop.f32.mrf.mxu0
        %796 = vdwg.mxu0
        %797 = vrot.lane.b32.xlu0 %v440, 120
        %v798 = vpop.permute.xlu0 %797
        %799 = vrot.lane.b32.xlu0 %v529, 120
        %v800 = vpop.permute.xlu0 %799
        %801 = vrot.lane.b32.xlu0 %v618, 120
        %v802 = vpop.permute.xlu0 %801
        %v803 = vsel %vm626, %v798, 0
        %v805 = vsel %vm626, %v800, 0
        %v807 = vsel %vm626, %v802, 0
        %809 = vmatprep.subr.mxu0 0.0
        %810 = vmatpush1.xpose.msra.mxu0 0.0
        %811 = vmatprep.subr.mxu0 0.0
        %812 = vmatpush1.xpose.msra.mxu0 0.0
        %813 = vmatprep.subr.mxu0 0.0
        %814 = vmatpush1.xpose.msra.mxu0 0.0
        %815 = vmatprep.subr.mxu0 0.0
        %816 = vmatpush1.xpose.msra.mxu0 0.0
        %817 = vmatprep.subr.mxu0 0.0
        %818 = vmatpush1.xpose.msra.mxu0 0.0
        %819 = vmatprep.subr.mxu0 0.0
        %820 = vmatpush1.xpose.msra.mxu0 0.0
        %821 = vmatprep.subr.mxu0 0.0
        %822 = vmatpush1.xpose.msra.mxu0 0.0
        %823 = vmatprep.subr.mxu0 0.0
        %824 = vmatpush1.xpose.msra.mxu0 0.0
        %825 = vmatprep.subr.mxu0 0.0
        %826 = vmatpush1.xpose.msra.mxu0 0.0
        %827 = vmatprep.subr.mxu0 0.0
        %828 = vmatpush1.xpose.msra.mxu0 0.0
        %829 = vmatprep.subr.mxu0 0.0
        %830 = vmatpush1.xpose.msra.mxu0 0.0
        %831 = vmatprep.subr.mxu0 0.0
        %832 = vmatpush1.xpose.msra.mxu0 0.0
        %833 = vmatprep.subr.mxu0 0.0
        %834 = vmatpush1.xpose.msra.mxu0 0.0
        %835 = vmatprep.subr.mxu0 0.0
        %836 = vmatpush1.xpose.msra.mxu0 0.0
        %837 = vmatprep.subr.mxu0 0.0
        %838 = vmatpush1.xpose.msra.mxu0 %v807
        %839 = vmatprep.subr.mxu0 0.0
        %840 = vmatpush1.xpose.msra.mxu0 %v805
        %841 = vmatprep.subr.mxu0 0.0
        %842 = vmatpush2.xpose.msra.mxu0 0.0
        %843 = vmatprep.subr.mxu0 0.0
        %844 = vmatpush2.xpose.msra.mxu0 0.0
        %845 = vmatprep.subr.mxu0 0.0
        %846 = vmatpush2.xpose.msra.mxu0 0.0
        %847 = vmatprep.subr.mxu0 0.0
        %848 = vmatpush2.xpose.msra.mxu0 0.0
        %849 = vmatprep.subr.mxu0 0.0
        %850 = vmatpush2.xpose.msra.mxu0 0.0
        %851 = vmatprep.subr.mxu0 0.0
        %852 = vmatpush2.xpose.msra.mxu0 0.0
        %853 = vmatprep.subr.mxu0 0.0
        %854 = vmatpush2.xpose.msra.mxu0 0.0
        %855 = vmatprep.subr.mxu0 0.0
        %856 = vmatpush2.xpose.msra.mxu0 0.0
        %857 = vmatprep.subr.mxu0 0.0
        %858 = vmatpush2.xpose.msra.mxu0 0.0
        %859 = vmatprep.subr.mxu0 0.0
        %860 = vmatpush2.xpose.msra.mxu0 0.0
        %861 = vmatprep.subr.mxu0 0.0
        %862 = vmatpush2.xpose.msra.mxu0 0.0
        %863 = vmatprep.subr.mxu0 0.0
        %864 = vmatpush2.xpose.msra.mxu0 0.0
        %865 = vmatprep.subr.mxu0 0.0
        %866 = vmatpush2.xpose.msra.mxu0 0.0
        %867 = vmatprep.subr.mxu0 0.0
        %868 = vmatpush2.xpose.msra.mxu0 0.0
        %869 = vmatprep.subr.mxu0 0.0
        %870 = vmatpush2.xpose.msra.mxu0 0.0
        %871 = vmatprep.subr.mxu0 0.0
        %872 = vmatpush2.xpose.msra.mxu0 0.0
        %873 = vmatprep.mubr.f32.mxu0 0.0
        %874 = vmatmul.mubr.f32.gmra.mxu0 %v803
        %v875 = vpop.f32.mrf.mxu0
        %v876 = vadd.f32 0.0, %v875
        %v877 = vpop.f32.mrf.mxu0
        %878 = vdwg.mxu0
        %v879 = vsel %vm706, %v876, -inf
        %880 = vmax.xlane.f32.xlu0 %v879
        %v881 = vpop.xlane.xlu0 %880
        %v882 = vsub.f32 %v876, %v881
        %v883 = vmul.f32 %v882, 1.442695
        %v884 = vpow.pop %v883
        %v885 = vsel %vm706, %v884, 0.0
        %886 = vadd.xlane.f32.xlu0 %v885
        %v887 = vpop.xlane.xlu0 %886
        %v888 = vrcp.pop %v887
        %v889 = vmul.f32 %v884, %v888
        %890 = vrot.lane.b32.xlu0 %v529, 88
        %v891 = vpop.permute.xlu0 %890
        %892 = vrot.lane.b32.xlu0 %v618, 88
        %v893 = vpop.permute.xlu0 %892
        %v897 = vsel %vm706, %v889, 0
        %899 = vmatprep.subr.mxu0 0.0
        %900 = vmatpush1.msra.mxu0 0.0
        %901 = vmatprep.subr.mxu0 0.0
        %902 = vmatpush1.msra.mxu0 0.0
        %903 = vmatprep.subr.mxu0 0.0
        %904 = vmatpush1.msra.mxu0 0.0
        %905 = vmatprep.subr.mxu0 0.0
        %906 = vmatpush1.msra.mxu0 0.0
        %907 = vmatprep.subr.mxu0 0.0
        %908 = vmatpush1.msra.mxu0 0.0
        %909 = vmatprep.subr.mxu0 0.0
        %910 = vmatpush1.msra.mxu0 0.0
        %911 = vmatprep.subr.mxu0 0.0
        %912 = vmatpush1.msra.mxu0 0.0
        %913 = vmatprep.subr.mxu0 0.0
        %914 = vmatpush1.msra.mxu0 0.0
        %915 = vmatprep.subr.mxu0 0.0
        %916 = vmatpush1.msra.mxu0 0.0
        %917 = vmatprep.subr.mxu0 0.0
        %918 = vmatpush1.msra.mxu0 0.0
        %919 = vmatprep.subr.mxu0 0.0
        %920 = vmatpush1.msra.mxu0 0.0
        %921 = vmatprep.subr.mxu0 0.0
        %922 = vmatpush1.msra.mxu0 0.0
        %923 = vmatprep.subr.mxu0 0.0
        %924 = vmatpush1.msra.mxu0 0.0
        %925 = vmatprep.subr.mxu0 0.0
        %926 = vmatpush1.msra.mxu0 0.0
        %927 = vmatprep.subr.mxu0 0.0
        %928 = vmatpush1.msra.mxu0 %v893
        %929 = vmatprep.subr.mxu0 0.0
        %930 = vmatpush1.msra.mxu0 %v891
        %931 = vmatprep.subr.mxu0 0.0
        %932 = vmatpush2.msra.mxu0 0.0
        %933 = vmatprep.subr.mxu0 0.0
        %934 = vmatpush2.msra.mxu0 0.0
        %935 = vmatprep.subr.mxu0 0.0
        %936 = vmatpush2.msra.mxu0 0.0
        %937 = vmatprep.subr.mxu0 0.0
        %938 = vmatpush2.msra.mxu0 0.0
        %939 = vmatprep.subr.mxu0 0.0
        %940 = vmatpush2.msra.mxu0 0.0
        %941 = vmatprep.subr.mxu0 0.0
        %942 = vmatpush2.msra.mxu0 0.0
        %943 = vmatprep.subr.mxu0 0.0
        %944 = vmatpush2.msra.mxu0 0.0
        %945 = vmatprep.subr.mxu0 0.0
        %946 = vmatpush2.msra.mxu0 0.0
        %947 = vmatprep.subr.mxu0 0.0
        %948 = vmatpush2.msra.mxu0 0.0
        %949 = vmatprep.subr.mxu0 0.0
        %950 = vmatpush2.msra.mxu0 0.0
        %951 = vmatprep.subr.mxu0 0.0
        %952 = vmatpush2.msra.mxu0 0.0
        %953 = vmatprep.subr.mxu0 0.0
        %954 = vmatpush2.msra.mxu0 0.0
        %955 = vmatprep.subr.mxu0 0.0
        %956 = vmatpush2.msra.mxu0 0.0
        %957 = vmatprep.subr.mxu0 0.0
        %958 = vmatpush2.msra.mxu0 0.0
        %959 = vmatprep.subr.mxu0 0.0
        %960 = vmatpush2.msra.mxu0 0.0
        %961 = vmatprep.subr.mxu0 0.0
        %962 = vmatpush2.msra.mxu0 0.0
        %963 = vmatprep.mubr.f32.mxu0 0.0
        %964 = vmatmul.mubr.f32.gmra.mxu0 %v897
        %v965 = vpop.f32.mrf.mxu0
        %v966 = vadd.f32 0.0, %v965
        %v967 = vpop.f32.mrf.mxu0
        %968 = vdwg.mxu0
        %969 = vrot.lane.b32.xlu0 %v440, 112
        %v970 = vpop.permute.xlu0 %969
        %971 = vrot.lane.b32.xlu0 %v529, 112
        %v972 = vpop.permute.xlu0 %971
        %973 = vrot.lane.b32.xlu0 %v618, 112
        %v974 = vpop.permute.xlu0 %973
        %v975 = vsel %vm626, %v970, 0
        %v977 = vsel %vm626, %v972, 0
        %v979 = vsel %vm626, %v974, 0
        %981 = vmatprep.subr.mxu0 0.0
        %982 = vmatpush1.xpose.msra.mxu0 0.0
        %983 = vmatprep.subr.mxu0 0.0
        %984 = vmatpush1.xpose.msra.mxu0 0.0
        %985 = vmatprep.subr.mxu0 0.0
        %986 = vmatpush1.xpose.msra.mxu0 0.0
        %987 = vmatprep.subr.mxu0 0.0
        %988 = vmatpush1.xpose.msra.mxu0 0.0
        %989 = vmatprep.subr.mxu0 0.0
        %990 = vmatpush1.xpose.msra.mxu0 0.0
        %991 = vmatprep.subr.mxu0 0.0
        %992 = vmatpush1.xpose.msra.mxu0 0.0
        %993 = vmatprep.subr.mxu0 0.0
        %994 = vmatpush1.xpose.msra.mxu0 0.0
        %995 = vmatprep.subr.mxu0 0.0
        %996 = vmatpush1.xpose.msra.mxu0 0.0
        %997 = vmatprep.subr.mxu0 0.0
        %998 = vmatpush1.xpose.msra.mxu0 0.0
        %999 = vmatprep.subr.mxu0 0.0
        %1000 = vmatpush1.xpose.msra.mxu0 0.0
        %1001 = vmatprep.subr.mxu0 0.0
        %1002 = vmatpush1.xpose.msra.mxu0 0.0
        %1003 = vmatprep.subr.mxu0 0.0
        %1004 = vmatpush1.xpose.msra.mxu0 0.0
        %1005 = vmatprep.subr.mxu0 0.0
        %1006 = vmatpush1.xpose.msra.mxu0 0.0
        %1007 = vmatprep.subr.mxu0 0.0
        %1008 = vmatpush1.xpose.msra.mxu0 0.0
        %1009 = vmatprep.subr.mxu0 0.0
        %1010 = vmatpush1.xpose.msra.mxu0 %v979
        %1011 = vmatprep.subr.mxu0 0.0
        %1012 = vmatpush1.xpose.msra.mxu0 %v977
        %1013 = vmatprep.subr.mxu0 0.0
        %1014 = vmatpush2.xpose.msra.mxu0 0.0
        %1015 = vmatprep.subr.mxu0 0.0
        %1016 = vmatpush2.xpose.msra.mxu0 0.0
        %1017 = vmatprep.subr.mxu0 0.0
        %1018 = vmatpush2.xpose.msra.mxu0 0.0
        %1019 = vmatprep.subr.mxu0 0.0
        %1020 = vmatpush2.xpose.msra.mxu0 0.0
        %1021 = vmatprep.subr.mxu0 0.0
        %1022 = vmatpush2.xpose.msra.mxu0 0.0
        %1023 = vmatprep.subr.mxu0 0.0
        %1024 = vmatpush2.xpose.msra.mxu0 0.0
        %1025 = vmatprep.subr.mxu0 0.0
        %1026 = vmatpush2.xpose.msra.mxu0 0.0
        %1027 = vmatprep.subr.mxu0 0.0
        %1028 = vmatpush2.xpose.msra.mxu0 0.0
        %1029 = vmatprep.subr.mxu0 0.0
        %1030 = vmatpush2.xpose.msra.mxu0 0.0
        %1031 = vmatprep.subr.mxu0 0.0
        %1032 = vmatpush2.xpose.msra.mxu0 0.0
        %1033 = vmatprep.subr.mxu0 0.0
        %1034 = vmatpush2.xpose.msra.mxu0 0.0
        %1035 = vmatprep.subr.mxu0 0.0
        %1036 = vmatpush2.xpose.msra.mxu0 0.0
        %1037 = vmatprep.subr.mxu0 0.0
        %1038 = vmatpush2.xpose.msra.mxu0 0.0
        %1039 = vmatprep.subr.mxu0 0.0
        %1040 = vmatpush2.xpose.msra.mxu0 0.0
        %1041 = vmatprep.subr.mxu0 0.0
        %1042 = vmatpush2.xpose.msra.mxu0 0.0
        %1043 = vmatprep.subr.mxu0 0.0
        %1044 = vmatpush2.xpose.msra.mxu0 0.0
        %1045 = vmatprep.mubr.f32.mxu0 0.0
        %1046 = vmatmul.mubr.f32.gmra.mxu0 %v975
        %v1047 = vpop.f32.mrf.mxu0
        %v1048 = vadd.f32 0.0, %v1047
        %v1049 = vpop.f32.mrf.mxu0
        %1050 = vdwg.mxu0
        %v1051 = vsel %vm706, %v1048, -inf
        %1052 = vmax.xlane.f32.xlu0 %v1051
        %v1053 = vpop.xlane.xlu0 %1052
        %v1054 = vsub.f32 %v1048, %v1053
        %v1055 = vmul.f32 %v1054, 1.442695
        %v1056 = vpow.pop %v1055
        %v1057 = vsel %vm706, %v1056, 0.0
        %1058 = vadd.xlane.f32.xlu0 %v1057
        %v1059 = vpop.xlane.xlu0 %1058
        %v1060 = vrcp.pop %v1059
        %v1061 = vmul.f32 %v1056, %v1060
        %1062 = vrot.lane.b32.xlu0 %v529, 80
        %v1063 = vpop.permute.xlu0 %1062
        %1064 = vrot.lane.b32.xlu0 %v618, 80
        %v1065 = vpop.permute.xlu0 %1064
        %v1069 = vsel %vm706, %v1061, 0
        %1071 = vmatprep.subr.mxu0 0.0
        %1072 = vmatpush1.msra.mxu0 0.0
        %1073 = vmatprep.subr.mxu0 0.0
        %1074 = vmatpush1.msra.mxu0 0.0
        %1075 = vmatprep.subr.mxu0 0.0
        %1076 = vmatpush1.msra.mxu0 0.0
        %1077 = vmatprep.subr.mxu0 0.0
        %1078 = vmatpush1.msra.mxu0 0.0
        %1079 = vmatprep.subr.mxu0 0.0
        %1080 = vmatpush1.msra.mxu0 0.0
        %1081 = vmatprep.subr.mxu0 0.0
        %1082 = vmatpush1.msra.mxu0 0.0
        %1083 = vmatprep.subr.mxu0 0.0
        %1084 = vmatpush1.msra.mxu0 0.0
        %1085 = vmatprep.subr.mxu0 0.0
        %1086 = vmatpush1.msra.mxu0 0.0
        %1087 = vmatprep.subr.mxu0 0.0
        %1088 = vmatpush1.msra.mxu0 0.0
        %1089 = vmatprep.subr.mxu0 0.0
        %1090 = vmatpush1.msra.mxu0 0.0
        %1091 = vmatprep.subr.mxu0 0.0
        %1092 = vmatpush1.msra.mxu0 0.0
        %1093 = vmatprep.subr.mxu0 0.0
        %1094 = vmatpush1.msra.mxu0 0.0
        %1095 = vmatprep.subr.mxu0 0.0
        %1096 = vmatpush1.msra.mxu0 0.0
        %1097 = vmatprep.subr.mxu0 0.0
        %1098 = vmatpush1.msra.mxu0 0.0
        %1099 = vmatprep.subr.mxu0 0.0
        %1100 = vmatpush1.msra.mxu0 %v1065
        %1101 = vmatprep.subr.mxu0 0.0
        %1102 = vmatpush1.msra.mxu0 %v1063
        %1103 = vmatprep.subr.mxu0 0.0
        %1104 = vmatpush2.msra.mxu0 0.0
        %1105 = vmatprep.subr.mxu0 0.0
        %1106 = vmatpush2.msra.mxu0 0.0
        %1107 = vmatprep.subr.mxu0 0.0
        %1108 = vmatpush2.msra.mxu0 0.0
        %1109 = vmatprep.subr.mxu0 0.0
        %1110 = vmatpush2.msra.mxu0 0.0
        %1111 = vmatprep.subr.mxu0 0.0
        %1112 = vmatpush2.msra.mxu0 0.0
        %1113 = vmatprep.subr.mxu0 0.0
        %1114 = vmatpush2.msra.mxu0 0.0
        %1115 = vmatprep.subr.mxu0 0.0
        %1116 = vmatpush2.msra.mxu0 0.0
        %1117 = vmatprep.subr.mxu0 0.0
        %1118 = vmatpush2.msra.mxu0 0.0
        %1119 = vmatprep.subr.mxu0 0.0
        %1120 = vmatpush2.msra.mxu0 0.0
        %1121 = vmatprep.subr.mxu0 0.0
        %1122 = vmatpush2.msra.mxu0 0.0
        %1123 = vmatprep.subr.mxu0 0.0
        %1124 = vmatpush2.msra.mxu0 0.0
        %1125 = vmatprep.subr.mxu0 0.0
        %1126 = vmatpush2.msra.mxu0 0.0
        %1127 = vmatprep.subr.mxu0 0.0
        %1128 = vmatpush2.msra.mxu0 0.0
        %1129 = vmatprep.subr.mxu0 0.0
        %1130 = vmatpush2.msra.mxu0 0.0
        %1131 = vmatprep.subr.mxu0 0.0
        %1132 = vmatpush2.msra.mxu0 0.0
        %1133 = vmatprep.subr.mxu0 0.0
        %1134 = vmatpush2.msra.mxu0 0.0
        %1135 = vmatprep.mubr.f32.mxu0 0.0
        %1136 = vmatmul.mubr.f32.gmra.mxu0 %v1069
        %v1137 = vpop.f32.mrf.mxu0
        %v1138 = vadd.f32 0.0, %v1137
        %v1139 = vpop.f32.mrf.mxu0
        %1140 = vdwg.mxu0
        %1141 = vrot.lane.b32.xlu0 %v440, 104
        %v1142 = vpop.permute.xlu0 %1141
        %1143 = vrot.lane.b32.xlu0 %v529, 104
        %v1144 = vpop.permute.xlu0 %1143
        %1145 = vrot.lane.b32.xlu0 %v618, 104
        %v1146 = vpop.permute.xlu0 %1145
        %v1147 = vsel %vm626, %v1142, 0
        %v1149 = vsel %vm626, %v1144, 0
        %v1151 = vsel %vm626, %v1146, 0
        %1153 = vmatprep.subr.mxu0 0.0
        %1154 = vmatpush1.xpose.msra.mxu0 0.0
        %1155 = vmatprep.subr.mxu0 0.0
        %1156 = vmatpush1.xpose.msra.mxu0 0.0
        %1157 = vmatprep.subr.mxu0 0.0
        %1158 = vmatpush1.xpose.msra.mxu0 0.0
        %1159 = vmatprep.subr.mxu0 0.0
        %1160 = vmatpush1.xpose.msra.mxu0 0.0
        %1161 = vmatprep.subr.mxu0 0.0
        %1162 = vmatpush1.xpose.msra.mxu0 0.0
        %1163 = vmatprep.subr.mxu0 0.0
        %1164 = vmatpush1.xpose.msra.mxu0 0.0
        %1165 = vmatprep.subr.mxu0 0.0
        %1166 = vmatpush1.xpose.msra.mxu0 0.0
        %1167 = vmatprep.subr.mxu0 0.0
        %1168 = vmatpush1.xpose.msra.mxu0 0.0
        %1169 = vmatprep.subr.mxu0 0.0
        %1170 = vmatpush1.xpose.msra.mxu0 0.0
        %1171 = vmatprep.subr.mxu0 0.0
        %1172 = vmatpush1.xpose.msra.mxu0 0.0
        %1173 = vmatprep.subr.mxu0 0.0
        %1174 = vmatpush1.xpose.msra.mxu0 0.0
        %1175 = vmatprep.subr.mxu0 0.0
        %1176 = vmatpush1.xpose.msra.mxu0 0.0
        %1177 = vmatprep.subr.mxu0 0.0
        %1178 = vmatpush1.xpose.msra.mxu0 0.0
        %1179 = vmatprep.subr.mxu0 0.0
        %1180 = vmatpush1.xpose.msra.mxu0 0.0
        %1181 = vmatprep.subr.mxu0 0.0
        %1182 = vmatpush1.xpose.msra.mxu0 %v1151
        %1183 = vmatprep.subr.mxu0 0.0
        %1184 = vmatpush1.xpose.msra.mxu0 %v1149
        %1185 = vmatprep.subr.mxu0 0.0
        %1186 = vmatpush2.xpose.msra.mxu0 0.0
        %1187 = vmatprep.subr.mxu0 0.0
        %1188 = vmatpush2.xpose.msra.mxu0 0.0
        %1189 = vmatprep.subr.mxu0 0.0
        %1190 = vmatpush2.xpose.msra.mxu0 0.0
        %1191 = vmatprep.subr.mxu0 0.0
        %1192 = vmatpush2.xpose.msra.mxu0 0.0
        %1193 = vmatprep.subr.mxu0 0.0
        %1194 = vmatpush2.xpose.msra.mxu0 0.0
        %1195 = vmatprep.subr.mxu0 0.0
        %1196 = vmatpush2.xpose.msra.mxu0 0.0
        %1197 = vmatprep.subr.mxu0 0.0
        %1198 = vmatpush2.xpose.msra.mxu0 0.0
        %1199 = vmatprep.subr.mxu0 0.0
        %1200 = vmatpush2.xpose.msra.mxu0 0.0
        %1201 = vmatprep.subr.mxu0 0.0
        %1202 = vmatpush2.xpose.msra.mxu0 0.0
        %1203 = vmatprep.subr.mxu0 0.0
        %1204 = vmatpush2.xpose.msra.mxu0 0.0
        %1205 = vmatprep.subr.mxu0 0.0
        %1206 = vmatpush2.xpose.msra.mxu0 0.0
        %1207 = vmatprep.subr.mxu0 0.0
        %1208 = vmatpush2.xpose.msra.mxu0 0.0
        %1209 = vmatprep.subr.mxu0 0.0
        %1210 = vmatpush2.xpose.msra.mxu0 0.0
        %1211 = vmatprep.subr.mxu0 0.0
        %1212 = vmatpush2.xpose.msra.mxu0 0.0
        %1213 = vmatprep.subr.mxu0 0.0
        %1214 = vmatpush2.xpose.msra.mxu0 0.0
        %1215 = vmatprep.subr.mxu0 0.0
        %1216 = vmatpush2.xpose.msra.mxu0 0.0
        %1217 = vmatprep.mubr.f32.mxu0 0.0
        %1218 = vmatmul.mubr.f32.gmra.mxu0 %v1147
        %v1219 = vpop.f32.mrf.mxu0
        %v1220 = vadd.f32 0.0, %v1219
        %v1221 = vpop.f32.mrf.mxu0
        %1222 = vdwg.mxu0
        %v1223 = vsel %vm706, %v1220, -inf
        %1224 = vmax.xlane.f32.xlu0 %v1223
        %v1225 = vpop.xlane.xlu0 %1224
        %v1226 = vsub.f32 %v1220, %v1225
        %v1227 = vmul.f32 %v1226, 1.442695
        %v1228 = vpow.pop %v1227
        %v1229 = vsel %vm706, %v1228, 0.0
        %1230 = vadd.xlane.f32.xlu0 %v1229
        %v1231 = vpop.xlane.xlu0 %1230
        %v1232 = vrcp.pop %v1231
        %v1233 = vmul.f32 %v1228, %v1232
        %1234 = vrot.lane.b32.xlu0 %v529, 72
        %v1235 = vpop.permute.xlu0 %1234
        %1236 = vrot.lane.b32.xlu0 %v618, 72
        %v1237 = vpop.permute.xlu0 %1236
        %v1241 = vsel %vm706, %v1233, 0
        %1243 = vmatprep.subr.mxu0 0.0
        %1244 = vmatpush1.msra.mxu0 0.0
        %1245 = vmatprep.subr.mxu0 0.0
        %1246 = vmatpush1.msra.mxu0 0.0
        %1247 = vmatprep.subr.mxu0 0.0
        %1248 = vmatpush1.msra.mxu0 0.0
        %1249 = vmatprep.subr.mxu0 0.0
        %1250 = vmatpush1.msra.mxu0 0.0
        %1251 = vmatprep.subr.mxu0 0.0
        %1252 = vmatpush1.msra.mxu0 0.0
        %1253 = vmatprep.subr.mxu0 0.0
        %1254 = vmatpush1.msra.mxu0 0.0
        %1255 = vmatprep.subr.mxu0 0.0
        %1256 = vmatpush1.msra.mxu0 0.0
        %1257 = vmatprep.subr.mxu0 0.0
        %1258 = vmatpush1.msra.mxu0 0.0
        %1259 = vmatprep.subr.mxu0 0.0
        %1260 = vmatpush1.msra.mxu0 0.0
        %1261 = vmatprep.subr.mxu0 0.0
        %1262 = vmatpush1.msra.mxu0 0.0
        %1263 = vmatprep.subr.mxu0 0.0
        %1264 = vmatpush1.msra.mxu0 0.0
        %1265 = vmatprep.subr.mxu0 0.0
        %1266 = vmatpush1.msra.mxu0 0.0
        %1267 = vmatprep.subr.mxu0 0.0
        %1268 = vmatpush1.msra.mxu0 0.0
        %1269 = vmatprep.subr.mxu0 0.0
        %1270 = vmatpush1.msra.mxu0 0.0
        %1271 = vmatprep.subr.mxu0 0.0
        %1272 = vmatpush1.msra.mxu0 %v1237
        %1273 = vmatprep.subr.mxu0 0.0
        %1274 = vmatpush1.msra.mxu0 %v1235
        %1275 = vmatprep.subr.mxu0 0.0
        %1276 = vmatpush2.msra.mxu0 0.0
        %1277 = vmatprep.subr.mxu0 0.0
        %1278 = vmatpush2.msra.mxu0 0.0
        %1279 = vmatprep.subr.mxu0 0.0
        %1280 = vmatpush2.msra.mxu0 0.0
        %1281 = vmatprep.subr.mxu0 0.0
        %1282 = vmatpush2.msra.mxu0 0.0
        %1283 = vmatprep.subr.mxu0 0.0
        %1284 = vmatpush2.msra.mxu0 0.0
        %1285 = vmatprep.subr.mxu0 0.0
        %1286 = vmatpush2.msra.mxu0 0.0
        %1287 = vmatprep.subr.mxu0 0.0
        %1288 = vmatpush2.msra.mxu0 0.0
        %1289 = vmatprep.subr.mxu0 0.0
        %1290 = vmatpush2.msra.mxu0 0.0
        %1291 = vmatprep.subr.mxu0 0.0
        %1292 = vmatpush2.msra.mxu0 0.0
        %1293 = vmatprep.subr.mxu0 0.0
        %1294 = vmatpush2.msra.mxu0 0.0
        %1295 = vmatprep.subr.mxu0 0.0
        %1296 = vmatpush2.msra.mxu0 0.0
        %1297 = vmatprep.subr.mxu0 0.0
        %1298 = vmatpush2.msra.mxu0 0.0
        %1299 = vmatprep.subr.mxu0 0.0
        %1300 = vmatpush2.msra.mxu0 0.0
        %1301 = vmatprep.subr.mxu0 0.0
        %1302 = vmatpush2.msra.mxu0 0.0
        %1303 = vmatprep.subr.mxu0 0.0
        %1304 = vmatpush2.msra.mxu0 0.0
        %1305 = vmatprep.subr.mxu0 0.0
        %1306 = vmatpush2.msra.mxu0 0.0
        %1307 = vmatprep.mubr.f32.mxu0 0.0
        %1308 = vmatmul.mubr.f32.gmra.mxu0 %v1241
        %v1309 = vpop.f32.mrf.mxu0
        %v1310 = vadd.f32 0.0, %v1309
        %v1311 = vpop.f32.mrf.mxu0
        %1312 = vdwg.mxu0
        %1314 = vrot.lane.b32.xlu0 %v966, 8
        %v1315 = vpop.permute.xlu0 %1314
        %1318 = vrot.lane.b32.xlu0 %v1138, 16
        %v1319 = vpop.permute.xlu0 %1318
        %1322 = vrot.lane.b32.xlu0 %v1310, 24
        %v1323 = vpop.permute.xlu0 %1322
        %v1325 = vsel %vm626, %v794, %v1315
        %v1326 = vsel %vm706, %v1325, %v1319
        %vm1327 = vcmask 195584
        %v1328 = vsel %vm1327, %v1326, %v1323
        %v1330 = vsel %vm626, %v445, 0
        %v1333 = vsel %vm626, %v534, 0
        %v1336 = vsel %vm626, %v623, 0
        %1338 = vmatprep.subr.mxu0 0.0
        %1339 = vmatpush1.xpose.msra.mxu0 0.0
        %1340 = vmatprep.subr.mxu0 0.0
        %1341 = vmatpush1.xpose.msra.mxu0 0.0
        %1342 = vmatprep.subr.mxu0 0.0
        %1343 = vmatpush1.xpose.msra.mxu0 0.0
        %1344 = vmatprep.subr.mxu0 0.0
        %1345 = vmatpush1.xpose.msra.mxu0 0.0
        %1346 = vmatprep.subr.mxu0 0.0
        %1347 = vmatpush1.xpose.msra.mxu0 0.0
        %1348 = vmatprep.subr.mxu0 0.0
        %1349 = vmatpush1.xpose.msra.mxu0 0.0
        %1350 = vmatprep.subr.mxu0 0.0
        %1351 = vmatpush1.xpose.msra.mxu0 0.0
        %1352 = vmatprep.subr.mxu0 0.0
        %1353 = vmatpush1.xpose.msra.mxu0 0.0
        %1354 = vmatprep.subr.mxu0 0.0
        %1355 = vmatpush1.xpose.msra.mxu0 0.0
        %1356 = vmatprep.subr.mxu0 0.0
        %1357 = vmatpush1.xpose.msra.mxu0 0.0
        %1358 = vmatprep.subr.mxu0 0.0
        %1359 = vmatpush1.xpose.msra.mxu0 0.0
        %1360 = vmatprep.subr.mxu0 0.0
        %1361 = vmatpush1.xpose.msra.mxu0 0.0
        %1362 = vmatprep.subr.mxu0 0.0
        %1363 = vmatpush1.xpose.msra.mxu0 0.0
        %1364 = vmatprep.subr.mxu0 0.0
        %1365 = vmatpush1.xpose.msra.mxu0 0.0
        %1366 = vmatprep.subr.mxu0 0.0
        %1367 = vmatpush1.xpose.msra.mxu0 %v1336
        %1368 = vmatprep.subr.mxu0 0.0
        %1369 = vmatpush1.xpose.msra.mxu0 %v1333
        %1370 = vmatprep.subr.mxu0 0.0
        %1371 = vmatpush2.xpose.msra.mxu0 0.0
        %1372 = vmatprep.subr.mxu0 0.0
        %1373 = vmatpush2.xpose.msra.mxu0 0.0
        %1374 = vmatprep.subr.mxu0 0.0
        %1375 = vmatpush2.xpose.msra.mxu0 0.0
        %1376 = vmatprep.subr.mxu0 0.0
        %1377 = vmatpush2.xpose.msra.mxu0 0.0
        %1378 = vmatprep.subr.mxu0 0.0
        %1379 = vmatpush2.xpose.msra.mxu0 0.0
        %1380 = vmatprep.subr.mxu0 0.0
        %1381 = vmatpush2.xpose.msra.mxu0 0.0
        %1382 = vmatprep.subr.mxu0 0.0
        %1383 = vmatpush2.xpose.msra.mxu0 0.0
        %1384 = vmatprep.subr.mxu0 0.0
        %1385 = vmatpush2.xpose.msra.mxu0 0.0
        %1386 = vmatprep.subr.mxu0 0.0
        %1387 = vmatpush2.xpose.msra.mxu0 0.0
        %1388 = vmatprep.subr.mxu0 0.0
        %1389 = vmatpush2.xpose.msra.mxu0 0.0
        %1390 = vmatprep.subr.mxu0 0.0
        %1391 = vmatpush2.xpose.msra.mxu0 0.0
        %1392 = vmatprep.subr.mxu0 0.0
        %1393 = vmatpush2.xpose.msra.mxu0 0.0
        %1394 = vmatprep.subr.mxu0 0.0
        %1395 = vmatpush2.xpose.msra.mxu0 0.0
        %1396 = vmatprep.subr.mxu0 0.0
        %1397 = vmatpush2.xpose.msra.mxu0 0.0
        %1398 = vmatprep.subr.mxu0 0.0
        %1399 = vmatpush2.xpose.msra.mxu0 0.0
        %1400 = vmatprep.subr.mxu0 0.0
        %1401 = vmatpush2.xpose.msra.mxu0 0.0
        %1402 = vmatprep.mubr.f32.mxu0 0.0
        %1403 = vmatmul.mubr.f32.gmra.mxu0 %v1330
        %v1404 = vpop.f32.mrf.mxu0
        %v1405 = vadd.f32 0.0, %v1404
        %v1406 = vpop.f32.mrf.mxu0
        %1407 = vdwg.mxu0
        %v1408 = vsel %vm706, %v1405, -inf
        %1409 = vmax.xlane.f32.xlu0 %v1408
        %v1410 = vpop.xlane.xlu0 %1409
        %v1411 = vsub.f32 %v1405, %v1410
        %v1412 = vmul.f32 %v1411, 1.442695
        %v1413 = vpow.pop %v1412
        %v1414 = vsel %vm706, %v1413, 0.0
        %1415 = vadd.xlane.f32.xlu0 %v1414
        %v1416 = vpop.xlane.xlu0 %1415
        %v1417 = vrcp.pop %v1416
        %v1418 = vmul.f32 %v1413, %v1417
        %1419 = vrot.lane.b32.xlu0 %v534, 96
        %v1420 = vpop.permute.xlu0 %1419
        %1421 = vrot.lane.b32.xlu0 %v623, 96
        %v1422 = vpop.permute.xlu0 %1421
        %v1426 = vsel %vm706, %v1418, 0
        %1428 = vmatprep.subr.mxu0 0.0
        %1429 = vmatpush1.msra.mxu0 0.0
        %1430 = vmatprep.subr.mxu0 0.0
        %1431 = vmatpush1.msra.mxu0 0.0
        %1432 = vmatprep.subr.mxu0 0.0
        %1433 = vmatpush1.msra.mxu0 0.0
        %1434 = vmatprep.subr.mxu0 0.0
        %1435 = vmatpush1.msra.mxu0 0.0
        %1436 = vmatprep.subr.mxu0 0.0
        %1437 = vmatpush1.msra.mxu0 0.0
        %1438 = vmatprep.subr.mxu0 0.0
        %1439 = vmatpush1.msra.mxu0 0.0
        %1440 = vmatprep.subr.mxu0 0.0
        %1441 = vmatpush1.msra.mxu0 0.0
        %1442 = vmatprep.subr.mxu0 0.0
        %1443 = vmatpush1.msra.mxu0 0.0
        %1444 = vmatprep.subr.mxu0 0.0
        %1445 = vmatpush1.msra.mxu0 0.0
        %1446 = vmatprep.subr.mxu0 0.0
        %1447 = vmatpush1.msra.mxu0 0.0
        %1448 = vmatprep.subr.mxu0 0.0
        %1449 = vmatpush1.msra.mxu0 0.0
        %1450 = vmatprep.subr.mxu0 0.0
        %1451 = vmatpush1.msra.mxu0 0.0
        %1452 = vmatprep.subr.mxu0 0.0
        %1453 = vmatpush1.msra.mxu0 0.0
        %1454 = vmatprep.subr.mxu0 0.0
        %1455 = vmatpush1.msra.mxu0 0.0
        %1456 = vmatprep.subr.mxu0 0.0
        %1457 = vmatpush1.msra.mxu0 %v1422
        %1458 = vmatprep.subr.mxu0 0.0
        %1459 = vmatpush1.msra.mxu0 %v1420
        %1460 = vmatprep.subr.mxu0 0.0
        %1461 = vmatpush2.msra.mxu0 0.0
        %1462 = vmatprep.subr.mxu0 0.0
        %1463 = vmatpush2.msra.mxu0 0.0
        %1464 = vmatprep.subr.mxu0 0.0
        %1465 = vmatpush2.msra.mxu0 0.0
        %1466 = vmatprep.subr.mxu0 0.0
        %1467 = vmatpush2.msra.mxu0 0.0
        %1468 = vmatprep.subr.mxu0 0.0
        %1469 = vmatpush2.msra.mxu0 0.0
        %1470 = vmatprep.subr.mxu0 0.0
        %1471 = vmatpush2.msra.mxu0 0.0
        %1472 = vmatprep.subr.mxu0 0.0
        %1473 = vmatpush2.msra.mxu0 0.0
        %1474 = vmatprep.subr.mxu0 0.0
        %1475 = vmatpush2.msra.mxu0 0.0
        %1476 = vmatprep.subr.mxu0 0.0
        %1477 = vmatpush2.msra.mxu0 0.0
        %1478 = vmatprep.subr.mxu0 0.0
        %1479 = vmatpush2.msra.mxu0 0.0
        %1480 = vmatprep.subr.mxu0 0.0
        %1481 = vmatpush2.msra.mxu0 0.0
        %1482 = vmatprep.subr.mxu0 0.0
        %1483 = vmatpush2.msra.mxu0 0.0
        %1484 = vmatprep.subr.mxu0 0.0
        %1485 = vmatpush2.msra.mxu0 0.0
        %1486 = vmatprep.subr.mxu0 0.0
        %1487 = vmatpush2.msra.mxu0 0.0
        %1488 = vmatprep.subr.mxu0 0.0
        %1489 = vmatpush2.msra.mxu0 0.0
        %1490 = vmatprep.subr.mxu0 0.0
        %1491 = vmatpush2.msra.mxu0 0.0
        %1492 = vmatprep.mubr.f32.mxu0 0.0
        %1493 = vmatmul.mubr.f32.gmra.mxu0 %v1426
        %v1494 = vpop.f32.mrf.mxu0
        %v1495 = vadd.f32 0.0, %v1494
        %v1496 = vpop.f32.mrf.mxu0
        %1497 = vdwg.mxu0
        %1498 = vrot.lane.b32.xlu0 %v445, 120
        %v1499 = vpop.permute.xlu0 %1498
        %1500 = vrot.lane.b32.xlu0 %v534, 120
        %v1501 = vpop.permute.xlu0 %1500
        %1502 = vrot.lane.b32.xlu0 %v623, 120
        %v1503 = vpop.permute.xlu0 %1502
        %v1504 = vsel %vm626, %v1499, 0
        %v1506 = vsel %vm626, %v1501, 0
        %v1508 = vsel %vm626, %v1503, 0
        %1510 = vmatprep.subr.mxu0 0.0
        %1511 = vmatpush1.xpose.msra.mxu0 0.0
        %1512 = vmatprep.subr.mxu0 0.0
        %1513 = vmatpush1.xpose.msra.mxu0 0.0
        %1514 = vmatprep.subr.mxu0 0.0
        %1515 = vmatpush1.xpose.msra.mxu0 0.0
        %1516 = vmatprep.subr.mxu0 0.0
        %1517 = vmatpush1.xpose.msra.mxu0 0.0
        %1518 = vmatprep.subr.mxu0 0.0
        %1519 = vmatpush1.xpose.msra.mxu0 0.0
        %1520 = vmatprep.subr.mxu0 0.0
        %1521 = vmatpush1.xpose.msra.mxu0 0.0
        %1522 = vmatprep.subr.mxu0 0.0
        %1523 = vmatpush1.xpose.msra.mxu0 0.0
        %1524 = vmatprep.subr.mxu0 0.0
        %1525 = vmatpush1.xpose.msra.mxu0 0.0
        %1526 = vmatprep.subr.mxu0 0.0
        %1527 = vmatpush1.xpose.msra.mxu0 0.0
        %1528 = vmatprep.subr.mxu0 0.0
        %1529 = vmatpush1.xpose.msra.mxu0 0.0
        %1530 = vmatprep.subr.mxu0 0.0
        %1531 = vmatpush1.xpose.msra.mxu0 0.0
        %1532 = vmatprep.subr.mxu0 0.0
        %1533 = vmatpush1.xpose.msra.mxu0 0.0
        %1534 = vmatprep.subr.mxu0 0.0
        %1535 = vmatpush1.xpose.msra.mxu0 0.0
        %1536 = vmatprep.subr.mxu0 0.0
        %1537 = vmatpush1.xpose.msra.mxu0 0.0
        %1538 = vmatprep.subr.mxu0 0.0
        %1539 = vmatpush1.xpose.msra.mxu0 %v1508
        %1540 = vmatprep.subr.mxu0 0.0
        %1541 = vmatpush1.xpose.msra.mxu0 %v1506
        %1542 = vmatprep.subr.mxu0 0.0
        %1543 = vmatpush2.xpose.msra.mxu0 0.0
        %1544 = vmatprep.subr.mxu0 0.0
        %1545 = vmatpush2.xpose.msra.mxu0 0.0
        %1546 = vmatprep.subr.mxu0 0.0
        %1547 = vmatpush2.xpose.msra.mxu0 0.0
        %1548 = vmatprep.subr.mxu0 0.0
        %1549 = vmatpush2.xpose.msra.mxu0 0.0
        %1550 = vmatprep.subr.mxu0 0.0
        %1551 = vmatpush2.xpose.msra.mxu0 0.0
        %1552 = vmatprep.subr.mxu0 0.0
        %1553 = vmatpush2.xpose.msra.mxu0 0.0
        %1554 = vmatprep.subr.mxu0 0.0
        %1555 = vmatpush2.xpose.msra.mxu0 0.0
        %1556 = vmatprep.subr.mxu0 0.0
        %1557 = vmatpush2.xpose.msra.mxu0 0.0
        %1558 = vmatprep.subr.mxu0 0.0
        %1559 = vmatpush2.xpose.msra.mxu0 0.0
        %1560 = vmatprep.subr.mxu0 0.0
        %1561 = vmatpush2.xpose.msra.mxu0 0.0
        %1562 = vmatprep.subr.mxu0 0.0
        %1563 = vmatpush2.xpose.msra.mxu0 0.0
        %1564 = vmatprep.subr.mxu0 0.0
        %1565 = vmatpush2.xpose.msra.mxu0 0.0
        %1566 = vmatprep.subr.mxu0 0.0
        %1567 = vmatpush2.xpose.msra.mxu0 0.0
        %1568 = vmatprep.subr.mxu0 0.0
        %1569 = vmatpush2.xpose.msra.mxu0 0.0
        %1570 = vmatprep.subr.mxu0 0.0
        %1571 = vmatpush2.xpose.msra.mxu0 0.0
        %1572 = vmatprep.subr.mxu0 0.0
        %1573 = vmatpush2.xpose.msra.mxu0 0.0
        %1574 = vmatprep.mubr.f32.mxu0 0.0
        %1575 = vmatmul.mubr.f32.gmra.mxu0 %v1504
        %v1576 = vpop.f32.mrf.mxu0
        %v1577 = vadd.f32 0.0, %v1576
        %v1578 = vpop.f32.mrf.mxu0
        %1579 = vdwg.mxu0
        %v1580 = vsel %vm706, %v1577, -inf
        %1581 = vmax.xlane.f32.xlu0 %v1580
        %v1582 = vpop.xlane.xlu0 %1581
        %v1583 = vsub.f32 %v1577, %v1582
        %v1584 = vmul.f32 %v1583, 1.442695
        %v1585 = vpow.pop %v1584
        %v1586 = vsel %vm706, %v1585, 0.0
        %1587 = vadd.xlane.f32.xlu0 %v1586
        %v1588 = vpop.xlane.xlu0 %1587
        %v1589 = vrcp.pop %v1588
        %v1590 = vmul.f32 %v1585, %v1589
        %1591 = vrot.lane.b32.xlu0 %v534, 88
        %v1592 = vpop.permute.xlu0 %1591
        %1593 = vrot.lane.b32.xlu0 %v623, 88
        %v1594 = vpop.permute.xlu0 %1593
        %v1598 = vsel %vm706, %v1590, 0
        %1600 = vmatprep.subr.mxu0 0.0
        %1601 = vmatpush1.msra.mxu0 0.0
        %1602 = vmatprep.subr.mxu0 0.0
        %1603 = vmatpush1.msra.mxu0 0.0
        %1604 = vmatprep.subr.mxu0 0.0
        %1605 = vmatpush1.msra.mxu0 0.0
        %1606 = vmatprep.subr.mxu0 0.0
        %1607 = vmatpush1.msra.mxu0 0.0
        %1608 = vmatprep.subr.mxu0 0.0
        %1609 = vmatpush1.msra.mxu0 0.0
        %1610 = vmatprep.subr.mxu0 0.0
        %1611 = vmatpush1.msra.mxu0 0.0
        %1612 = vmatprep.subr.mxu0 0.0
        %1613 = vmatpush1.msra.mxu0 0.0
        %1614 = vmatprep.subr.mxu0 0.0
        %1615 = vmatpush1.msra.mxu0 0.0
        %1616 = vmatprep.subr.mxu0 0.0
        %1617 = vmatpush1.msra.mxu0 0.0
        %1618 = vmatprep.subr.mxu0 0.0
        %1619 = vmatpush1.msra.mxu0 0.0
        %1620 = vmatprep.subr.mxu0 0.0
        %1621 = vmatpush1.msra.mxu0 0.0
        %1622 = vmatprep.subr.mxu0 0.0
        %1623 = vmatpush1.msra.mxu0 0.0
        %1624 = vmatprep.subr.mxu0 0.0
        %1625 = vmatpush1.msra.mxu0 0.0
        %1626 = vmatprep.subr.mxu0 0.0
        %1627 = vmatpush1.msra.mxu0 0.0
        %1628 = vmatprep.subr.mxu0 0.0
        %1629 = vmatpush1.msra.mxu0 %v1594
        %1630 = vmatprep.subr.mxu0 0.0
        %1631 = vmatpush1.msra.mxu0 %v1592
        %1632 = vmatprep.subr.mxu0 0.0
        %1633 = vmatpush2.msra.mxu0 0.0
        %1634 = vmatprep.subr.mxu0 0.0
        %1635 = vmatpush2.msra.mxu0 0.0
        %1636 = vmatprep.subr.mxu0 0.0
        %1637 = vmatpush2.msra.mxu0 0.0
        %1638 = vmatprep.subr.mxu0 0.0
        %1639 = vmatpush2.msra.mxu0 0.0
        %1640 = vmatprep.subr.mxu0 0.0
        %1641 = vmatpush2.msra.mxu0 0.0
        %1642 = vmatprep.subr.mxu0 0.0
        %1643 = vmatpush2.msra.mxu0 0.0
        %1644 = vmatprep.subr.mxu0 0.0
        %1645 = vmatpush2.msra.mxu0 0.0
        %1646 = vmatprep.subr.mxu0 0.0
        %1647 = vmatpush2.msra.mxu0 0.0
        %1648 = vmatprep.subr.mxu0 0.0
        %1649 = vmatpush2.msra.mxu0 0.0
        %1650 = vmatprep.subr.mxu0 0.0
        %1651 = vmatpush2.msra.mxu0 0.0
        %1652 = vmatprep.subr.mxu0 0.0
        %1653 = vmatpush2.msra.mxu0 0.0
        %1654 = vmatprep.subr.mxu0 0.0
        %1655 = vmatpush2.msra.mxu0 0.0
        %1656 = vmatprep.subr.mxu0 0.0
        %1657 = vmatpush2.msra.mxu0 0.0
        %1658 = vmatprep.subr.mxu0 0.0
        %1659 = vmatpush2.msra.mxu0 0.0
        %1660 = vmatprep.subr.mxu0 0.0
        %1661 = vmatpush2.msra.mxu0 0.0
        %1662 = vmatprep.subr.mxu0 0.0
        %1663 = vmatpush2.msra.mxu0 0.0
        %1664 = vmatprep.mubr.f32.mxu0 0.0
        %1665 = vmatmul.mubr.f32.gmra.mxu0 %v1598
        %v1666 = vpop.f32.mrf.mxu0
        %v1667 = vadd.f32 0.0, %v1666
        %v1668 = vpop.f32.mrf.mxu0
        %1669 = vdwg.mxu0
        %1670 = vrot.lane.b32.xlu0 %v445, 112
        %v1671 = vpop.permute.xlu0 %1670
        %1672 = vrot.lane.b32.xlu0 %v534, 112
        %v1673 = vpop.permute.xlu0 %1672
        %1674 = vrot.lane.b32.xlu0 %v623, 112
        %v1675 = vpop.permute.xlu0 %1674
        %v1676 = vsel %vm626, %v1671, 0
        %v1678 = vsel %vm626, %v1673, 0
        %v1680 = vsel %vm626, %v1675, 0
        %1682 = vmatprep.subr.mxu0 0.0
        %1683 = vmatpush1.xpose.msra.mxu0 0.0
        %1684 = vmatprep.subr.mxu0 0.0
        %1685 = vmatpush1.xpose.msra.mxu0 0.0
        %1686 = vmatprep.subr.mxu0 0.0
        %1687 = vmatpush1.xpose.msra.mxu0 0.0
        %1688 = vmatprep.subr.mxu0 0.0
        %1689 = vmatpush1.xpose.msra.mxu0 0.0
        %1690 = vmatprep.subr.mxu0 0.0
        %1691 = vmatpush1.xpose.msra.mxu0 0.0
        %1692 = vmatprep.subr.mxu0 0.0
        %1693 = vmatpush1.xpose.msra.mxu0 0.0
        %1694 = vmatprep.subr.mxu0 0.0
        %1695 = vmatpush1.xpose.msra.mxu0 0.0
        %1696 = vmatprep.subr.mxu0 0.0
        %1697 = vmatpush1.xpose.msra.mxu0 0.0
        %1698 = vmatprep.subr.mxu0 0.0
        %1699 = vmatpush1.xpose.msra.mxu0 0.0
        %1700 = vmatprep.subr.mxu0 0.0
        %1701 = vmatpush1.xpose.msra.mxu0 0.0
        %1702 = vmatprep.subr.mxu0 0.0
        %1703 = vmatpush1.xpose.msra.mxu0 0.0
        %1704 = vmatprep.subr.mxu0 0.0
        %1705 = vmatpush1.xpose.msra.mxu0 0.0
        %1706 = vmatprep.subr.mxu0 0.0
        %1707 = vmatpush1.xpose.msra.mxu0 0.0
        %1708 = vmatprep.subr.mxu0 0.0
        %1709 = vmatpush1.xpose.msra.mxu0 0.0
        %1710 = vmatprep.subr.mxu0 0.0
        %1711 = vmatpush1.xpose.msra.mxu0 %v1680
        %1712 = vmatprep.subr.mxu0 0.0
        %1713 = vmatpush1.xpose.msra.mxu0 %v1678
        %1714 = vmatprep.subr.mxu0 0.0
        %1715 = vmatpush2.xpose.msra.mxu0 0.0
        %1716 = vmatprep.subr.mxu0 0.0
        %1717 = vmatpush2.xpose.msra.mxu0 0.0
        %1718 = vmatprep.subr.mxu0 0.0
        %1719 = vmatpush2.xpose.msra.mxu0 0.0
        %1720 = vmatprep.subr.mxu0 0.0
        %1721 = vmatpush2.xpose.msra.mxu0 0.0
        %1722 = vmatprep.subr.mxu0 0.0
        %1723 = vmatpush2.xpose.msra.mxu0 0.0
        %1724 = vmatprep.subr.mxu0 0.0
        %1725 = vmatpush2.xpose.msra.mxu0 0.0
        %1726 = vmatprep.subr.mxu0 0.0
        %1727 = vmatpush2.xpose.msra.mxu0 0.0
        %1728 = vmatprep.subr.mxu0 0.0
        %1729 = vmatpush2.xpose.msra.mxu0 0.0
        %1730 = vmatprep.subr.mxu0 0.0
        %1731 = vmatpush2.xpose.msra.mxu0 0.0
        %1732 = vmatprep.subr.mxu0 0.0
        %1733 = vmatpush2.xpose.msra.mxu0 0.0
        %1734 = vmatprep.subr.mxu0 0.0
        %1735 = vmatpush2.xpose.msra.mxu0 0.0
        %1736 = vmatprep.subr.mxu0 0.0
        %1737 = vmatpush2.xpose.msra.mxu0 0.0
        %1738 = vmatprep.subr.mxu0 0.0
        %1739 = vmatpush2.xpose.msra.mxu0 0.0
        %1740 = vmatprep.subr.mxu0 0.0
        %1741 = vmatpush2.xpose.msra.mxu0 0.0
        %1742 = vmatprep.subr.mxu0 0.0
        %1743 = vmatpush2.xpose.msra.mxu0 0.0
        %1744 = vmatprep.subr.mxu0 0.0
        %1745 = vmatpush2.xpose.msra.mxu0 0.0
        %1746 = vmatprep.mubr.f32.mxu0 0.0
        %1747 = vmatmul.mubr.f32.gmra.mxu0 %v1676
        %v1748 = vpop.f32.mrf.mxu0
        %v1749 = vadd.f32 0.0, %v1748
        %v1750 = vpop.f32.mrf.mxu0
        %1751 = vdwg.mxu0
        %v1752 = vsel %vm706, %v1749, -inf
        %1753 = vmax.xlane.f32.xlu0 %v1752
        %v1754 = vpop.xlane.xlu0 %1753
        %v1755 = vsub.f32 %v1749, %v1754
        %v1756 = vmul.f32 %v1755, 1.442695
        %v1757 = vpow.pop %v1756
        %v1758 = vsel %vm706, %v1757, 0.0
        %1759 = vadd.xlane.f32.xlu0 %v1758
        %v1760 = vpop.xlane.xlu0 %1759
        %v1761 = vrcp.pop %v1760
        %v1762 = vmul.f32 %v1757, %v1761
        %1763 = vrot.lane.b32.xlu0 %v534, 80
        %v1764 = vpop.permute.xlu0 %1763
        %1765 = vrot.lane.b32.xlu0 %v623, 80
        %v1766 = vpop.permute.xlu0 %1765
        %v1770 = vsel %vm706, %v1762, 0
        %1772 = vmatprep.subr.mxu0 0.0
        %1773 = vmatpush1.msra.mxu0 0.0
        %1774 = vmatprep.subr.mxu0 0.0
        %1775 = vmatpush1.msra.mxu0 0.0
        %1776 = vmatprep.subr.mxu0 0.0
        %1777 = vmatpush1.msra.mxu0 0.0
        %1778 = vmatprep.subr.mxu0 0.0
        %1779 = vmatpush1.msra.mxu0 0.0
        %1780 = vmatprep.subr.mxu0 0.0
        %1781 = vmatpush1.msra.mxu0 0.0
        %1782 = vmatprep.subr.mxu0 0.0
        %1783 = vmatpush1.msra.mxu0 0.0
        %1784 = vmatprep.subr.mxu0 0.0
        %1785 = vmatpush1.msra.mxu0 0.0
        %1786 = vmatprep.subr.mxu0 0.0
        %1787 = vmatpush1.msra.mxu0 0.0
        %1788 = vmatprep.subr.mxu0 0.0
        %1789 = vmatpush1.msra.mxu0 0.0
        %1790 = vmatprep.subr.mxu0 0.0
        %1791 = vmatpush1.msra.mxu0 0.0
        %1792 = vmatprep.subr.mxu0 0.0
        %1793 = vmatpush1.msra.mxu0 0.0
        %1794 = vmatprep.subr.mxu0 0.0
        %1795 = vmatpush1.msra.mxu0 0.0
        %1796 = vmatprep.subr.mxu0 0.0
        %1797 = vmatpush1.msra.mxu0 0.0
        %1798 = vmatprep.subr.mxu0 0.0
        %1799 = vmatpush1.msra.mxu0 0.0
        %1800 = vmatprep.subr.mxu0 0.0
        %1801 = vmatpush1.msra.mxu0 %v1766
        %1802 = vmatprep.subr.mxu0 0.0
        %1803 = vmatpush1.msra.mxu0 %v1764
        %1804 = vmatprep.subr.mxu0 0.0
        %1805 = vmatpush2.msra.mxu0 0.0
        %1806 = vmatprep.subr.mxu0 0.0
        %1807 = vmatpush2.msra.mxu0 0.0
        %1808 = vmatprep.subr.mxu0 0.0
        %1809 = vmatpush2.msra.mxu0 0.0
        %1810 = vmatprep.subr.mxu0 0.0
        %1811 = vmatpush2.msra.mxu0 0.0
        %1812 = vmatprep.subr.mxu0 0.0
        %1813 = vmatpush2.msra.mxu0 0.0
        %1814 = vmatprep.subr.mxu0 0.0
        %1815 = vmatpush2.msra.mxu0 0.0
        %1816 = vmatprep.subr.mxu0 0.0
        %1817 = vmatpush2.msra.mxu0 0.0
        %1818 = vmatprep.subr.mxu0 0.0
        %1819 = vmatpush2.msra.mxu0 0.0
        %1820 = vmatprep.subr.mxu0 0.0
        %1821 = vmatpush2.msra.mxu0 0.0
        %1822 = vmatprep.subr.mxu0 0.0
        %1823 = vmatpush2.msra.mxu0 0.0
        %1824 = vmatprep.subr.mxu0 0.0
        %1825 = vmatpush2.msra.mxu0 0.0
        %1826 = vmatprep.subr.mxu0 0.0
        %1827 = vmatpush2.msra.mxu0 0.0
        %1828 = vmatprep.subr.mxu0 0.0
        %1829 = vmatpush2.msra.mxu0 0.0
        %1830 = vmatprep.subr.mxu0 0.0
        %1831 = vmatpush2.msra.mxu0 0.0
        %1832 = vmatprep.subr.mxu0 0.0
        %1833 = vmatpush2.msra.mxu0 0.0
        %1834 = vmatprep.subr.mxu0 0.0
        %1835 = vmatpush2.msra.mxu0 0.0
        %1836 = vmatprep.mubr.f32.mxu0 0.0
        %1837 = vmatmul.mubr.f32.gmra.mxu0 %v1770
        %v1838 = vpop.f32.mrf.mxu0
        %v1839 = vadd.f32 0.0, %v1838
        %v1840 = vpop.f32.mrf.mxu0
        %1841 = vdwg.mxu0
        %1842 = vrot.lane.b32.xlu0 %v445, 104
        %v1843 = vpop.permute.xlu0 %1842
        %1844 = vrot.lane.b32.xlu0 %v534, 104
        %v1845 = vpop.permute.xlu0 %1844
        %1846 = vrot.lane.b32.xlu0 %v623, 104
        %v1847 = vpop.permute.xlu0 %1846
        %v1848 = vsel %vm626, %v1843, 0
        %v1850 = vsel %vm626, %v1845, 0
        %v1852 = vsel %vm626, %v1847, 0
        %1854 = vmatprep.subr.mxu0 0.0
        %1855 = vmatpush1.xpose.msra.mxu0 0.0
        %1856 = vmatprep.subr.mxu0 0.0
        %1857 = vmatpush1.xpose.msra.mxu0 0.0
        %1858 = vmatprep.subr.mxu0 0.0
        %1859 = vmatpush1.xpose.msra.mxu0 0.0
        %1860 = vmatprep.subr.mxu0 0.0
        %1861 = vmatpush1.xpose.msra.mxu0 0.0
        %1862 = vmatprep.subr.mxu0 0.0
        %1863 = vmatpush1.xpose.msra.mxu0 0.0
        %1864 = vmatprep.subr.mxu0 0.0
        %1865 = vmatpush1.xpose.msra.mxu0 0.0
        %1866 = vmatprep.subr.mxu0 0.0
        %1867 = vmatpush1.xpose.msra.mxu0 0.0
        %1868 = vmatprep.subr.mxu0 0.0
        %1869 = vmatpush1.xpose.msra.mxu0 0.0
        %1870 = vmatprep.subr.mxu0 0.0
        %1871 = vmatpush1.xpose.msra.mxu0 0.0
        %1872 = vmatprep.subr.mxu0 0.0
        %1873 = vmatpush1.xpose.msra.mxu0 0.0
        %1874 = vmatprep.subr.mxu0 0.0
        %1875 = vmatpush1.xpose.msra.mxu0 0.0
        %1876 = vmatprep.subr.mxu0 0.0
        %1877 = vmatpush1.xpose.msra.mxu0 0.0
        %1878 = vmatprep.subr.mxu0 0.0
        %1879 = vmatpush1.xpose.msra.mxu0 0.0
        %1880 = vmatprep.subr.mxu0 0.0
        %1881 = vmatpush1.xpose.msra.mxu0 0.0
        %1882 = vmatprep.subr.mxu0 0.0
        %1883 = vmatpush1.xpose.msra.mxu0 %v1852
        %1884 = vmatprep.subr.mxu0 0.0
        %1885 = vmatpush1.xpose.msra.mxu0 %v1850
        %1886 = vmatprep.subr.mxu0 0.0
        %1887 = vmatpush2.xpose.msra.mxu0 0.0
        %1888 = vmatprep.subr.mxu0 0.0
        %1889 = vmatpush2.xpose.msra.mxu0 0.0
        %1890 = vmatprep.subr.mxu0 0.0
        %1891 = vmatpush2.xpose.msra.mxu0 0.0
        %1892 = vmatprep.subr.mxu0 0.0
        %1893 = vmatpush2.xpose.msra.mxu0 0.0
        %1894 = vmatprep.subr.mxu0 0.0
        %1895 = vmatpush2.xpose.msra.mxu0 0.0
        %1896 = vmatprep.subr.mxu0 0.0
        %1897 = vmatpush2.xpose.msra.mxu0 0.0
        %1898 = vmatprep.subr.mxu0 0.0
        %1899 = vmatpush2.xpose.msra.mxu0 0.0
        %1900 = vmatprep.subr.mxu0 0.0
        %1901 = vmatpush2.xpose.msra.mxu0 0.0
        %1902 = vmatprep.subr.mxu0 0.0
        %1903 = vmatpush2.xpose.msra.mxu0 0.0
        %1904 = vmatprep.subr.mxu0 0.0
        %1905 = vmatpush2.xpose.msra.mxu0 0.0
        %1906 = vmatprep.subr.mxu0 0.0
        %1907 = vmatpush2.xpose.msra.mxu0 0.0
        %1908 = vmatprep.subr.mxu0 0.0
        %1909 = vmatpush2.xpose.msra.mxu0 0.0
        %1910 = vmatprep.subr.mxu0 0.0
        %1911 = vmatpush2.xpose.msra.mxu0 0.0
        %1912 = vmatprep.subr.mxu0 0.0
        %1913 = vmatpush2.xpose.msra.mxu0 0.0
        %1914 = vmatprep.subr.mxu0 0.0
        %1915 = vmatpush2.xpose.msra.mxu0 0.0
        %1916 = vmatprep.subr.mxu0 0.0
        %1917 = vmatpush2.xpose.msra.mxu0 0.0
        %1918 = vmatprep.mubr.f32.mxu0 0.0
        %1919 = vmatmul.mubr.f32.gmra.mxu0 %v1848
        %v1920 = vpop.f32.mrf.mxu0
        %v1921 = vadd.f32 0.0, %v1920
        %v1922 = vpop.f32.mrf.mxu0
        %1923 = vdwg.mxu0
        %v1924 = vsel %vm706, %v1921, -inf
        %1925 = vmax.xlane.f32.xlu0 %v1924
        %v1926 = vpop.xlane.xlu0 %1925
        %v1927 = vsub.f32 %v1921, %v1926
        %v1928 = vmul.f32 %v1927, 1.442695
        %v1929 = vpow.pop %v1928
        %v1930 = vsel %vm706, %v1929, 0.0
        %1931 = vadd.xlane.f32.xlu0 %v1930
        %v1932 = vpop.xlane.xlu0 %1931
        %v1933 = vrcp.pop %v1932
        %v1934 = vmul.f32 %v1929, %v1933
        %1935 = vrot.lane.b32.xlu0 %v534, 72
        %v1936 = vpop.permute.xlu0 %1935
        %1937 = vrot.lane.b32.xlu0 %v623, 72
        %v1938 = vpop.permute.xlu0 %1937
        %v1942 = vsel %vm706, %v1934, 0
        %1944 = vmatprep.subr.mxu0 0.0
        %1945 = vmatpush1.msra.mxu0 0.0
        %1946 = vmatprep.subr.mxu0 0.0
        %1947 = vmatpush1.msra.mxu0 0.0
        %1948 = vmatprep.subr.mxu0 0.0
        %1949 = vmatpush1.msra.mxu0 0.0
        %1950 = vmatprep.subr.mxu0 0.0
        %1951 = vmatpush1.msra.mxu0 0.0
        %1952 = vmatprep.subr.mxu0 0.0
        %1953 = vmatpush1.msra.mxu0 0.0
        %1954 = vmatprep.subr.mxu0 0.0
        %1955 = vmatpush1.msra.mxu0 0.0
        %1956 = vmatprep.subr.mxu0 0.0
        %1957 = vmatpush1.msra.mxu0 0.0
        %1958 = vmatprep.subr.mxu0 0.0
        %1959 = vmatpush1.msra.mxu0 0.0
        %1960 = vmatprep.subr.mxu0 0.0
        %1961 = vmatpush1.msra.mxu0 0.0
        %1962 = vmatprep.subr.mxu0 0.0
        %1963 = vmatpush1.msra.mxu0 0.0
        %1964 = vmatprep.subr.mxu0 0.0
        %1965 = vmatpush1.msra.mxu0 0.0
        %1966 = vmatprep.subr.mxu0 0.0
        %1967 = vmatpush1.msra.mxu0 0.0
        %1968 = vmatprep.subr.mxu0 0.0
        %1969 = vmatpush1.msra.mxu0 0.0
        %1970 = vmatprep.subr.mxu0 0.0
        %1971 = vmatpush1.msra.mxu0 0.0
        %1972 = vmatprep.subr.mxu0 0.0
        %1973 = vmatpush1.msra.mxu0 %v1938
        %1974 = vmatprep.subr.mxu0 0.0
        %1975 = vmatpush1.msra.mxu0 %v1936
        %1976 = vmatprep.subr.mxu0 0.0
        %1977 = vmatpush2.msra.mxu0 0.0
        %1978 = vmatprep.subr.mxu0 0.0
        %1979 = vmatpush2.msra.mxu0 0.0
        %1980 = vmatprep.subr.mxu0 0.0
        %1981 = vmatpush2.msra.mxu0 0.0
        %1982 = vmatprep.subr.mxu0 0.0
        %1983 = vmatpush2.msra.mxu0 0.0
        %1984 = vmatprep.subr.mxu0 0.0
        %1985 = vmatpush2.msra.mxu0 0.0
        %1986 = vmatprep.subr.mxu0 0.0
        %1987 = vmatpush2.msra.mxu0 0.0
        %1988 = vmatprep.subr.mxu0 0.0
        %1989 = vmatpush2.msra.mxu0 0.0
        %1990 = vmatprep.subr.mxu0 0.0
        %1991 = vmatpush2.msra.mxu0 0.0
        %1992 = vmatprep.subr.mxu0 0.0
        %1993 = vmatpush2.msra.mxu0 0.0
        %1994 = vmatprep.subr.mxu0 0.0
        %1995 = vmatpush2.msra.mxu0 0.0
        %1996 = vmatprep.subr.mxu0 0.0
        %1997 = vmatpush2.msra.mxu0 0.0
        %1998 = vmatprep.subr.mxu0 0.0
        %1999 = vmatpush2.msra.mxu0 0.0
        %2000 = vmatprep.subr.mxu0 0.0
        %2001 = vmatpush2.msra.mxu0 0.0
        %2002 = vmatprep.subr.mxu0 0.0
        %2003 = vmatpush2.msra.mxu0 0.0
        %2004 = vmatprep.subr.mxu0 0.0
        %2005 = vmatpush2.msra.mxu0 0.0
        %2006 = vmatprep.subr.mxu0 0.0
        %2007 = vmatpush2.msra.mxu0 0.0
        %2008 = vmatprep.mubr.f32.mxu0 0.0
        %2009 = vmatmul.mubr.f32.gmra.mxu0 %v1942
        %v2010 = vpop.f32.mrf.mxu0
        %v2011 = vadd.f32 0.0, %v2010
        %v2012 = vpop.f32.mrf.mxu0
        %2013 = vdwg.mxu0
        %2015 = vrot.lane.b32.xlu0 %v1667, 8
        %v2016 = vpop.permute.xlu0 %2015
        %2019 = vrot.lane.b32.xlu0 %v1839, 16
        %v2020 = vpop.permute.xlu0 %2019
        %2023 = vrot.lane.b32.xlu0 %v2011, 24
        %v2024 = vpop.permute.xlu0 %2023
        %v2026 = vsel %vm626, %v1495, %v2016
        %v2027 = vsel %vm706, %v2026, %v2020
        %v2028 = vsel %vm1327, %v2027, %v2024
        %v2029 = vld [vmem:[%s6] sm:$0xff]
        %v2030 = vld [vmem:[%s6 + $0x8] sm:$0xff]
        %v2031 = vld [vmem:[%s6 + $0x10] sm:$0xff]
        %v2032 = vld [vmem:[%s6 + $0x18] sm:$0xff]
        %v2033 = vlaneseq
        %v2034 = vshrl.u32 %v2033, 7
        %v2035 = vsub.s32 3, %v2034
        %v2036 = vrot.slane %v351, %v2035
        %v2038 = vsel %vm366, %v1328, 0
        %v2041 = vsel %vm366, %v2028, 0
        %2043 = vmatprep.subr.mxu0 0.0
        %2044 = vmatpush1.msra.mxu0 0.0
        %2045 = vmatprep.subr.mxu0 0.0
        %2046 = vmatpush1.msra.mxu0 0.0
        %2047 = vmatprep.subr.mxu0 0.0
        %2048 = vmatpush1.msra.mxu0 0.0
        %2049 = vmatprep.subr.mxu0 0.0
        %2050 = vmatpush1.msra.mxu0 0.0
        %2051 = vmatprep.subr.mxu0 0.0
        %2052 = vmatpush1.msra.mxu0 0.0
        %2053 = vmatprep.subr.mxu0 0.0
        %2054 = vmatpush1.msra.mxu0 0.0
        %2055 = vmatprep.subr.mxu0 0.0
        %2056 = vmatpush1.msra.mxu0 0.0
        %2057 = vmatprep.subr.mxu0 0.0
        %2058 = vmatpush1.msra.mxu0 0.0
        %2059 = vmatprep.subr.mxu0 0.0
        %2060 = vmatpush1.msra.mxu0 0.0
        %2061 = vmatprep.subr.mxu0 0.0
        %2062 = vmatpush1.msra.mxu0 0.0
        %2063 = vmatprep.subr.mxu0 0.0
        %2064 = vmatpush1.msra.mxu0 0.0
        %2065 = vmatprep.subr.mxu0 0.0
        %2066 = vmatpush1.msra.mxu0 0.0
        %2067 = vmatprep.subr.mxu0 0.0
        %2068 = vmatpush1.msra.mxu0 %v2032
        %2069 = vmatprep.subr.mxu0 0.0
        %2070 = vmatpush1.msra.mxu0 %v2031
        %2071 = vmatprep.subr.mxu0 0.0
        %2072 = vmatpush1.msra.mxu0 %v2030
        %2073 = vmatprep.subr.mxu0 0.0
        %2074 = vmatpush1.msra.mxu0 %v2029
        %2075 = vmatprep.subr.mxu0 0.0
        %2076 = vmatpush2.msra.mxu0 0.0
        %2077 = vmatprep.subr.mxu0 0.0
        %2078 = vmatpush2.msra.mxu0 0.0
        %2079 = vmatprep.subr.mxu0 0.0
        %2080 = vmatpush2.msra.mxu0 0.0
        %2081 = vmatprep.subr.mxu0 0.0
        %2082 = vmatpush2.msra.mxu0 0.0
        %2083 = vmatprep.subr.mxu0 0.0
        %2084 = vmatpush2.msra.mxu0 0.0
        %2085 = vmatprep.subr.mxu0 0.0
        %2086 = vmatpush2.msra.mxu0 0.0
        %2087 = vmatprep.subr.mxu0 0.0
        %2088 = vmatpush2.msra.mxu0 0.0
        %2089 = vmatprep.subr.mxu0 0.0
        %2090 = vmatpush2.msra.mxu0 0.0
        %2091 = vmatprep.subr.mxu0 0.0
        %2092 = vmatpush2.msra.mxu0 0.0
        %2093 = vmatprep.subr.mxu0 0.0
        %2094 = vmatpush2.msra.mxu0 0.0
        %2095 = vmatprep.subr.mxu0 0.0
        %2096 = vmatpush2.msra.mxu0 0.0
        %2097 = vmatprep.subr.mxu0 0.0
        %2098 = vmatpush2.msra.mxu0 0.0
        %2099 = vmatprep.subr.mxu0 0.0
        %2100 = vmatpush2.msra.mxu0 0.0
        %2101 = vmatprep.subr.mxu0 0.0
        %2102 = vmatpush2.msra.mxu0 0.0
        %2103 = vmatprep.subr.mxu0 0.0
        %2104 = vmatpush2.msra.mxu0 0.0
        %2105 = vmatprep.subr.mxu0 0.0
        %2106 = vmatpush2.msra.mxu0 0.0
        %2107 = vmatprep.mubr.f32.mxu0 0.0
        %2108 = vmatmul.mubr.f32.gmra.mxu0 %v2038
        %v2109 = vpop.f32.mrf.mxu0
        %v2110 = vadd.f32 %v2036, %v2109
        %v2111 = vpop.f32.mrf.mxu0
        %2112 = vmatprep.mubr.f32.mxu0 0.0
        %2113 = vmatmul.mubr.f32.gmra.mxu0 %v2041
        %v2114 = vpop.f32.mrf.mxu0
        %v2115 = vadd.f32 %v2036, %v2114
        %v2116 = vpop.f32.mrf.mxu0
        %2117 = vdwg.mxu0
        %2118 = vst.msk [vmem:[%s331] sm:$0xff] %vm366, %v2110
        %s2119 = scalar_lea.vmem %s331, 8 [#allocation2]
        %2120 = vst.msk [vmem:[%s2119] sm:$0xff] %vm366, %v2115
        %s2121 = sand.u32 %s213, 1
        %s2122 = scalar_lea.sflag [#allocation3], %s2121
        %s2123 = sand.u32 %s213, 1
        %s2124 = smul.addr %s2123, 16
        %s2125 = scalar_lea.vmem [#allocation2], %s2124
        // Predicated region
        $region53: #{multimodal_attention.1} parent=51 // pred_check
          %p2126 = pneg %p223
        $region54: #{multimodal_attention.1} parent=51 // pred_check_branch
          %2128 = sbr.rel (%p2126) target = $region56
        $region55: #{multimodal_attention.1} parent=51 // pred_region
          %s2129 = smul.u32 2, %s22
          %s2131 = ssub.s32 256, 256
          %2132 = vsyncadd %s2122, %s2131
          %s2133 = smul.addr %s2129, 128
          %s2134 = scalar_lea.hbm %s8, %s2133
          %s2135 = sshll.u32 %s2125, 4
          %s2136 = int_to_ptr.vmem [resolvable:$true] %s2135
          %2141 = dma.vmem_to_hbm [thread:$0]  %s2136, 256, %s2134, %s2122, 128, 128, 8
        $region56: #{multimodal_attention.1} parent=51 // pred_fallthru
          _
      $region52: #{multimodal_attention.1} parent=5 // pred_fallthru
        _
      %p2142 = scmp.le.s32.totalorder 2, %s17
      // Predicated region
      $region57: #{multimodal_attention.1} parent=5 // pred_check
        %p2143 = pneg %p2142
      $region58: #{multimodal_attention.1} parent=5 // pred_check_branch
        %2145 = sbr.rel (%p2143) target = $region60
      $region59: #{multimodal_attention.1} parent=5 // pred_region
        %s2146 = ssub.s32 %s17, 2
        // Predicated region
        $region61: #{multimodal_attention.1} parent=59 // pred_check
          %p2147 = pneg %p229
        $region62: #{multimodal_attention.1} parent=59 // pred_check_branch
          %2149 = sbr.rel (%p2147) target = $region64
        $region63: #{multimodal_attention.1} parent=59 // pred_region
          %s2150 = sand.u32 %s214, 1
          %s2151 = scalar_lea.sflag [#allocation3], %s2150
          %s2152 = sand.u32 %s214, 1
          %s2153 = smul.addr %s2152, 16
          %s2154 = scalar_lea.vmem [#allocation2], %s2153
          %2155 = dma.done %s2151, 256
        $region64: #{multimodal_attention.1} parent=59 // pred_fallthru
          _
      $region60: #{multimodal_attention.1} parent=5 // pred_fallthru
        _
    $region6: #{multimodal_attention.1} parent=1 // loop_footer
      %s21 = sadd.s32 1, %s17
    $region7: #{multimodal_attention.1} parent=1 // loop_footer_branch
      %16 = sbr.rel target = $region3
    $region8: #{multimodal_attention.1} parent=1 // loop_exit
      _
    %2156 = vsyncpa [#allocation3], 1
    %s2157 = scalar_lea.sflag [#allocation3], 1
    %2158 = vsyncpa %s2157, 1

</llo_original>
